<compile_context>
chip_gen: v7x
topology: tpu7x:2x2x1
jax: 0.10.0
libtpu: 0.0.40
codegen_flags: <defaults>
</compile_context>

<pallas_src>
import functools

import jax
import jax.numpy as jnp
from jax import lax
from jax.experimental import pallas as pl
from jax.experimental.pallas import tpu as pltpu


# --------------------------------------------------------------------------- #
# Kernel
# --------------------------------------------------------------------------- #
def _self_attn_kernel(add, tq, with_att, mm_dtype,
                      gamma_ref,
                      x_ref, wqT_ref, bq_ref, wkT_ref, bk_ref, wvT_ref, bv_ref,
                      *rest):
    """Grid = (batch, q_tile).  x_ref block: (1, C, N), channel-first."""
    if with_att:
        out_ref, att_ref, qT_ref, kT_ref, vT_ref = rest
    else:
        out_ref, qT_ref, kT_ref, vT_ref = rest
        att_ref = None

    qi = pl.program_id(1)

    # ---- Per-batch projections Q^T/K^T/V^T: computed once at the first query
    #      tile of each batch element, reused across all query tiles.
    @pl.when(qi == 0)
    def _():
        x_full = x_ref[0].astype(mm_dtype)                         # (C, N)
        wq = wqT_ref[...].astype(mm_dtype)                         # (dq, C)
        wk = wkT_ref[...].astype(mm_dtype)                         # (dq, C)
        wv = wvT_ref[...].astype(mm_dtype)                         # (Cout, C)
        qT = lax.dot_general(wq, x_full, (((1,), (0,)), ((), ())),
                             preferred_element_type=jnp.float32) + bq_ref[...]
        kT = lax.dot_general(wk, x_full, (((1,), (0,)), ((), ())),
                             preferred_element_type=jnp.float32) + bk_ref[...]
        vT = lax.dot_general(wv, x_full, (((1,), (0,)), ((), ())),
                             preferred_element_type=jnp.float32) + bv_ref[...]
        qT_ref[...] = qT.astype(qT_ref.dtype)
        kT_ref[...] = kT.astype(kT_ref.dtype)
        vT_ref[...] = vT.astype(vT_ref.dtype)

    # ---- One (TQ, N) attention tile and one (Cout, TQ) output tile per step.
    col0 = pl.multiple_of(qi * tq, tq)
    q_t = qT_ref[:, pl.ds(col0, tq)]                               # (dq, TQ)

    # energy = q^T @ kT -> (TQ, N): contract over dq (dim 0 of both operands).
    energy = lax.dot_general(q_t, kT_ref[...], (((0,), (0,)), ((), ())),
                             preferred_element_type=jnp.float32)

    # Numerically stable softmax over the key axis (last dim, lane-aligned).
    e_max = jnp.max(energy, axis=-1, keepdims=True)
    e = jnp.exp(energy - e_max)
    denom = jnp.sum(e, axis=-1, keepdims=True)
    attention = e * pl.reciprocal(denom, approx=False)             # (TQ, N) f32

    # outT = vT @ attention^T -> (Cout, TQ): contract over N.
    outT = lax.dot_general(vT_ref[...], attention.astype(vT_ref.dtype),
                           (((1,), (1,)), ((), ())),
                           preferred_element_type=jnp.float32)

    gamma = gamma_ref[0]
    if add:
        outT = gamma * outT + x_ref[0, :, pl.ds(col0, tq)]         # Cout == C
    else:
        outT = gamma * outT

    out_ref[0] = outT.astype(out_ref.dtype)
    if att_ref is not None:
        att_ref[0] = attention.astype(att_ref.dtype)


# --------------------------------------------------------------------------- #
# VMEM / tiling heuristics (generation aware)
# --------------------------------------------------------------------------- #
def _vmem_budget_bytes():
    """Physical VMEM with ~15% headroom for Mosaic internal scratch/semaphores."""
    try:
        cap = pltpu.get_tpu_info().vmem_capacity_bytes
    except Exception:
        cap = 64 * 2**20          # conservative default (v7x-sized per core)
    return int(cap * 0.85)


def _estimate_vmem_bytes(N, tq, C, Cout, dq, att_itemsize, mm_itemsize):
    f32 = 4
    dbuf = (2 * C * N * f32                                   # x block (double buffered)
            + 2 * Cout * tq * f32                             # out block
            + 2 * tq * N * att_itemsize                       # attention block (0 if off)
            + 2 * (2 * C * dq + C * Cout + 2 * dq + Cout) * f32)   # weights / biases
    scratch = (2 * dq + Cout) * N * mm_itemsize               # Q^T, K^T, V^T
    live = 3 * tq * N * f32 + (C + Cout + dq) * tq * f32      # energy/e/attention + tiles
    return dbuf + scratch + live


def _pick_tq(N, fits):
    cands = [c for c in (512, 256, 128) if N % c == 0]
    if not cands:
        return N                  # small / non-multiple-of-128 spatial sizes: single tile
    for c in cands:
        if fits(c):
            return c
    return cands[-1]


# --------------------------------------------------------------------------- #
# Wrapper
# --------------------------------------------------------------------------- #
def self_attn_pallas(x_nchw, params, *, add=False, tq=None,
                     return_attention=True, attention_dtype=jnp.float32,
                     use_bf16_matmul=False):
    """x_nchw: (B, C, W, H) float32.  Returns (out_nchw, attention-or-None)."""
    B, C, W, H = x_nchw.shape
    N = W * H
    wq, bq = params["wq"], params["bq"]
    wk, bk = params["wk"], params["bk"]
    wv, bv = params["wv"], params["bv"]
    gamma = params["gamma"]
    dq = wq.shape[1]
    Cout = wv.shape[1]
    if add:
        assert Cout == C, "residual add requires out_dim == in_dim"

    mm_dtype = jnp.bfloat16 if use_bf16_matmul else jnp.float32
    mm_itemsize = jnp.dtype(mm_dtype).itemsize
    att_itemsize = jnp.dtype(attention_dtype).itemsize if return_attention else 0

    budget = _vmem_budget_bytes()
    if tq is None:
        tq = _pick_tq(N, lambda c: _estimate_vmem_bytes(
            N, c, C, Cout, dq, att_itemsize, mm_itemsize) <= budget)
    assert N % tq == 0, f"N={N} must be divisible by tq={tq}"
    n_qt = N // tq

    est = _estimate_vmem_bytes(N, tq, C, Cout, dq, att_itemsize, mm_itemsize)
    vmem_limit = int(min(budget, max(32 * 2**20, int(1.5 * est))))

    # NCHW -> (B, C, N): pure reshape (matches torch .view).  Weights go in
    # pre-transposed (d, C) so every in-kernel projection is a natural MXU
    # contraction (no in-kernel operand relayout); these transposes are tiny
    # one-time XLA ops outside the kernel.
    x_bcn = x_nchw.reshape(B, C, N)
    wqT = wq.T                     # (dq, C)
    wkT = wk.T                     # (dq, C)
    wvT = wv.T                     # (Cout, C)
    bq_col = bq.reshape(dq, 1)
    bk_col = bk.reshape(dq, 1)
    bv_col = bv.reshape(Cout, 1)

    kernel = functools.partial(_self_attn_kernel, add, tq, return_attention, mm_dtype)

    out_shapes = [jax.ShapeDtypeStruct((B, Cout, N), jnp.float32)]
    out_specs = [pl.BlockSpec((1, Cout, tq), lambda b, qi: (b, 0, qi))]
    if return_attention:
        out_shapes.append(jax.ShapeDtypeStruct((B, N, N), attention_dtype))
        out_specs.append(pl.BlockSpec((1, tq, N), lambda b, qi: (b, qi, 0)))

    in_specs = [
        pl.BlockSpec(memory_space=pltpu.MemorySpace.SMEM),         # gamma (1,)
        pl.BlockSpec((1, C, N), lambda b, qi: (b, 0, 0)),          # x (per batch)
        pl.BlockSpec((dq, C), lambda b, qi: (0, 0)),               # Wq^T
        pl.BlockSpec((dq, 1), lambda b, qi: (0, 0)),               # bq (column)
        pl.BlockSpec((dq, C), lambda b, qi: (0, 0)),               # Wk^T
        pl.BlockSpec((dq, 1), lambda b, qi: (0, 0)),               # bk (column)
        pl.BlockSpec((Cout, C), lambda b, qi: (0, 0)),             # Wv^T
        pl.BlockSpec((Cout, 1), lambda b, qi: (0, 0)),             # bv (column)
    ]

    scratch_shapes = [
        pltpu.VMEM((dq, N), mm_dtype),      # Q^T, persists across q tiles
        pltpu.VMEM((dq, N), mm_dtype),      # K^T
        pltpu.VMEM((Cout, N), mm_dtype),    # V^T
    ]

    results = pl.pallas_call(
        kernel,
        out_shape=tuple(out_shapes),
        grid=(B, n_qt),
        in_specs=in_specs,
        out_specs=tuple(out_specs),
        scratch_shapes=scratch_shapes,
        compiler_params=pltpu.CompilerParams(
            # q-tile axis must stay "arbitrary": @pl.when(qi == 0) seeds the
            # per-batch Q/K/V scratch sequentially.  For B == 1 on a 2-TC chip
            # the projections would need to move to XLA before this axis can
            # be marked "parallel".
            dimension_semantics=("parallel", "arbitrary"),
            vmem_limit_bytes=vmem_limit,
        ),
    )(gamma, x_bcn, wqT, bq_col, wkT, bk_col, wvT, bv_col)

    if return_attention:
        out_bcn, attention = results
    else:
        (out_bcn,) = results
        attention = None

    # (B, Cout, N) -> (B, Cout, W, H): pure reshape (matches torch .view).
    out_nchw = out_bcn.reshape(B, Cout, W, H)
    return out_nchw, attention


# --------------------------------------------------------------------------- #
# Pure-JAX reference (mirrors the PyTorch forward exactly)
# --------------------------------------------------------------------------- #
def self_attn_reference(x_nchw, params, *, add=False):
    B, C, W, H = x_nchw.shape
    N = W * H
    x_bcn = x_nchw.reshape(B, C, N)
    q = jnp.einsum("bcn,cd->bnd", x_bcn, params["wq"]) + params["bq"]        # (B,N,dq)
    k = jnp.einsum("bcn,cd->bdn", x_bcn, params["wk"]) + params["bk"].reshape(1, -1, 1)
    v = jnp.einsum("bcn,cd->bdn", x_bcn, params["wv"]) + params["bv"].reshape(1, -1, 1)
    energy = jnp.einsum("bnd,bdm->bnm", q, k)                                # (B,N,N)
    attention = jax.nn.softmax(energy, axis=-1)
    out = jnp.einsum("bdn,bmn->bdm", v, attention)                           # (B,Cout,N)
    out = out.reshape(B, -1, W, H)
    gamma = params["gamma"][0]
    out = gamma * out + x_nchw if add else gamma * out
    return out, attention


def make_params(key, in_dim, out_dim, ratio):
    dq = in_dim // ratio
    ks = jax.random.split(key, 7)
    scale = 0.1
    return {
        "wq": scale * jax.random.normal(ks[0], (in_dim, dq), jnp.float32),
        "bq": scale * jax.random.normal(ks[1], (1, dq), jnp.float32),
        "wk": scale * jax.random.normal(ks[2], (in_dim, dq), jnp.float32),
        "bk": scale * jax.random.normal(ks[3], (1, dq), jnp.float32),
        "wv": scale * jax.random.normal(ks[4], (in_dim, out_dim), jnp.float32),
        "bv": scale * jax.random.normal(ks[5], (1, out_dim), jnp.float32),
        # nn.Parameter(torch.zeros(1)) in __init__; nonzero here so the
        # attention path is actually exercised (shape matches the module).
        "gamma": jnp.array([0.5], jnp.float32),
    }


def _run_case(key, B, C, W, H, ratio, out_dim, add, tq, *,
              return_attention=True, use_bf16_matmul=False,
              out_tol=(2e-4, 2e-4), att_tol=(2e-5, 2e-5)):
    kx, kp = jax.random.split(key)
    x = jax.random.normal(kx, (B, C, W, H), jnp.float32)
    params = make_params(kp, C, out_dim, ratio)

    out, att = self_attn_pallas(x, params, add=add, tq=tq,
                                return_attention=return_attention,
                                use_bf16_matmul=use_bf16_matmul)
    out = jax.block_until_ready(out)
    if att is not None:
        att = jax.block_until_ready(att)

    out_ref, att_ref = self_attn_reference(x, params, add=add)

    N = W * H
    assert out.shape == (B, out_dim, W, H)
    assert jnp.allclose(out, out_ref, atol=out_tol[0], rtol=out_tol[1]), "out mismatch"
    if return_attention:
        assert att.shape == (B, N, N)
        assert jnp.allclose(att, att_ref, atol=att_tol[0], rtol=att_tol[1]), \
            "attention mismatch"


if __name__ == "__main__":
    key = jax.random.PRNGKey(0)
    k1, k2, k3 = jax.random.split(key, 3)

    # Case 1: residual add (out_dim == in_dim), N = 256, TQ = 128 -> 2 q tiles
    # per batch (exercises persistent Q/K/V scratch + row tiling), fp32 math.
    _run_case(k1, B=2, C=32, W=16, H=16, ratio=8, out_dim=32, add=True, tq=128)

    # Case 2: no residual, out_dim != in_dim, small N = 64 -> single-tile
    # fallback with auto tq / auto VMEM sizing.
    _run_case(k2, B=2, C=32, W=8, H=8, ratio=8, out_dim=16, add=False, tq=None)

    # Case 3: perf options — no attention writeback + bf16 MXU operands
    # (f32 accumulation).  Looser tolerance on `out` only.
    _run_case(k3, B=1, C=32, W=16, H=16, ratio=8, out_dim=32, add=False, tq=128,
              return_attention=False, use_bf16_matmul=True,
              out_tol=(5e-2, 5e-2))

    print("KERNEL_OK")
</pallas_src>

<mosaic_0001>
module attributes {stable_mosaic.version = 11 : i64} {
  func.func @_self_attn_kernel(%arg0: i32, %arg1: i32, %arg2: memref<1xf32, #tpu.memory_space<smem>>, %arg3: memref<1x32x256xf32, #tpu.memory_space<vmem>>, %arg4: memref<4x32xf32, #tpu.memory_space<vmem>>, %arg5: memref<4x1xf32, #tpu.memory_space<vmem>>, %arg6: memref<4x32xf32, #tpu.memory_space<vmem>>, %arg7: memref<4x1xf32, #tpu.memory_space<vmem>>, %arg8: memref<32x32xf32, #tpu.memory_space<vmem>>, %arg9: memref<32x1xf32, #tpu.memory_space<vmem>>, %arg10: memref<1x32x128xf32, #tpu.memory_space<vmem>>, %arg11: memref<1x128x256xf32, #tpu.memory_space<vmem>>, %arg12: memref<4x256xf32, #tpu.memory_space<vmem>>, %arg13: memref<4x256xf32, #tpu.memory_space<vmem>>, %arg14: memref<32x256xf32, #tpu.memory_space<vmem>>) attributes {dimension_semantics = [#tpu.dimension_semantics<parallel>, #tpu.dimension_semantics<arbitrary>], iteration_bounds = array<i64: 2, 2>, scalar_prefetch = 0 : i64, scratch_operands = 3 : i64, tpu.core_type = #tpu.core_type<tc>, window_params = [{transform_indices = @transform_0, window_bounds = array<i64: 1>}, {transform_indices = @transform_1, window_bounds = array<i64: 1, 32, 256>}, {pipeline_mode = #tpu.pipeline_mode<synchronous>, transform_indices = @transform_2, window_bounds = array<i64: 4, 32>}, {pipeline_mode = #tpu.pipeline_mode<synchronous>, transform_indices = @transform_3, window_bounds = array<i64: 4, 1>}, {pipeline_mode = #tpu.pipeline_mode<synchronous>, transform_indices = @transform_4, window_bounds = array<i64: 4, 32>}, {pipeline_mode = #tpu.pipeline_mode<synchronous>, transform_indices = @transform_5, window_bounds = array<i64: 4, 1>}, {pipeline_mode = #tpu.pipeline_mode<synchronous>, transform_indices = @transform_6, window_bounds = array<i64: 32, 32>}, {pipeline_mode = #tpu.pipeline_mode<synchronous>, transform_indices = @transform_7, window_bounds = array<i64: 32, 1>}, {transform_indices = @transform_8, window_bounds = array<i64: 1, 32, 128>}, {transform_indices = @transform_9, window_bounds = array<i64: 1, 128, 256>}]} {
    %c0_i32 = arith.constant 0 : i32
    %0 = arith.cmpi eq, %arg1, %c0_i32 : i32
    %1 = arith.extui %0 : i1 to i32
    %c0_i32_0 = arith.constant 0 : i32
    %2 = arith.cmpi ne, %1, %c0_i32_0 : i32
    scf.if %2 {
      %c0_17 = arith.constant 0 : index
      %c0_18 = arith.constant 0 : index
      %c0_19 = arith.constant 0 : index
      %34 = vector.load %arg3[%c0_17, %c0_18, %c0_19] : memref<1x32x256xf32, #tpu.memory_space<vmem>>, vector<1x32x256xf32>
      %35 = vector.shape_cast %34 : vector<1x32x256xf32> to vector<32x256xf32>
      %c0_20 = arith.constant 0 : index
      %c0_21 = arith.constant 0 : index
      %36 = vector.load %arg4[%c0_20, %c0_21] : memref<4x32xf32, #tpu.memory_space<vmem>>, vector<4x32xf32>
      %c0_22 = arith.constant 0 : index
      %c0_23 = arith.constant 0 : index
      %37 = vector.load %arg6[%c0_22, %c0_23] : memref<4x32xf32, #tpu.memory_space<vmem>>, vector<4x32xf32>
      %c0_24 = arith.constant 0 : index
      %c0_25 = arith.constant 0 : index
      %38 = vector.load %arg8[%c0_24, %c0_25] : memref<32x32xf32, #tpu.memory_space<vmem>>, vector<32x32xf32>
      %cst_26 = arith.constant dense<0.000000e+00> : vector<4x256xf32>
      %39 = tpu.matmul %36, %35, %cst_26 {dimension_numbers = #tpu.dot_dimension_numbers<[1], [0], [0], [1], [0, 0, 1, 1], [], []>} : vector<4x32xf32>, vector<32x256xf32>, vector<4x256xf32> -> vector<4x256xf32>
      %c0_27 = arith.constant 0 : index
      %c0_28 = arith.constant 0 : index
      %40 = vector.load %arg5[%c0_27, %c0_28] : memref<4x1xf32, #tpu.memory_space<vmem>>, vector<4x1xf32>
      %41 = vector.broadcast %40 : vector<4x1xf32> to vector<4x256xf32>
      %42 = arith.addf %39, %41 : vector<4x256xf32>
      %cst_29 = arith.constant dense<0.000000e+00> : vector<4x256xf32>
      %43 = tpu.matmul %37, %35, %cst_29 {dimension_numbers = #tpu.dot_dimension_numbers<[1], [0], [0], [1], [0, 0, 1, 1], [], []>} : vector<4x32xf32>, vector<32x256xf32>, vector<4x256xf32> -> vector<4x256xf32>
      %c0_30 = arith.constant 0 : index
      %c0_31 = arith.constant 0 : index
      %44 = vector.load %arg7[%c0_30, %c0_31] : memref<4x1xf32, #tpu.memory_space<vmem>>, vector<4x1xf32>
      %45 = vector.broadcast %44 : vector<4x1xf32> to vector<4x256xf32>
      %46 = arith.addf %43, %45 : vector<4x256xf32>
      %cst_32 = arith.constant dense<0.000000e+00> : vector<32x256xf32>
      %47 = tpu.matmul %38, %35, %cst_32 {dimension_numbers = #tpu.dot_dimension_numbers<[1], [0], [0], [1], [0, 0, 1, 1], [], []>} : vector<32x32xf32>, vector<32x256xf32>, vector<32x256xf32> -> vector<32x256xf32>
      %c0_33 = arith.constant 0 : index
      %c0_34 = arith.constant 0 : index
      %48 = vector.load %arg9[%c0_33, %c0_34] : memref<32x1xf32, #tpu.memory_space<vmem>>, vector<32x1xf32>
      %49 = vector.broadcast %48 : vector<32x1xf32> to vector<32x256xf32>
      %50 = arith.addf %47, %49 : vector<32x256xf32>
      %c0_35 = arith.constant 0 : index
      %c0_36 = arith.constant 0 : index
      %51 = vector.load %arg12[%c0_35, %c0_36] : memref<4x256xf32, #tpu.memory_space<vmem>>, vector<4x256xf32>
      tpu.vector_store %arg12[%c0_35, %c0_36], %42 {strides = array<i32>} : memref<4x256xf32, #tpu.memory_space<vmem>>, vector<4x256xf32>,
      %c0_37 = arith.constant 0 : index
      %c0_38 = arith.constant 0 : index
      %52 = vector.load %arg13[%c0_37, %c0_38] : memref<4x256xf32, #tpu.memory_space<vmem>>, vector<4x256xf32>
      tpu.vector_store %arg13[%c0_37, %c0_38], %46 {strides = array<i32>} : memref<4x256xf32, #tpu.memory_space<vmem>>, vector<4x256xf32>,
      %c0_39 = arith.constant 0 : index
      %c0_40 = arith.constant 0 : index
      %53 = vector.load %arg14[%c0_39, %c0_40] : memref<32x256xf32, #tpu.memory_space<vmem>>, vector<32x256xf32>
      tpu.vector_store %arg14[%c0_39, %c0_40], %50 {strides = array<i32>} : memref<32x256xf32, #tpu.memory_space<vmem>>, vector<32x256xf32>,
    } else {
    }
    %c128_i32 = arith.constant 128 : i32
    %3 = arith.muli %arg1, %c128_i32 : i32
    %4 = tpu.assume_multiple %3, 128 : i32
    %c0 = arith.constant 0 : index
    %5 = arith.index_cast %4 : i32 to index
    %6 = vector.load %arg12[%c0, %5] : memref<4x256xf32, #tpu.memory_space<vmem>>, vector<4x128xf32>
    %c0_1 = arith.constant 0 : index
    %c0_2 = arith.constant 0 : index
    %7 = vector.load %arg13[%c0_1, %c0_2] : memref<4x256xf32, #tpu.memory_space<vmem>>, vector<4x256xf32>
    %cst = arith.constant dense<0.000000e+00> : vector<128x256xf32>
    %8 = tpu.matmul %6, %7, %cst {dimension_numbers = #tpu.dot_dimension_numbers<[0], [0], [1], [1], [0, 1, 1, 1], [], []>} : vector<4x128xf32>, vector<4x256xf32>, vector<128x256xf32> -> vector<128x256xf32>
    %cst_3 = arith.constant dense<0xFF800000> : vector<128xf32>
    %9 = vector.multi_reduction <maximumf>, %8, %cst_3 [1] : vector<128x256xf32> to vector<128xf32>
    %10 = vector.shape_cast %9 : vector<128xf32> to vector<128x1xf32>
    %11 = vector.broadcast %10 : vector<128x1xf32> to vector<128x256xf32>
    %12 = arith.subf %8, %11 : vector<128x256xf32>
    %13 = math.exp %12 : vector<128x256xf32>
    %cst_4 = arith.constant dense<0.000000e+00> : vector<128xf32>
    %14 = vector.multi_reduction <add>, %13, %cst_4 [1] : vector<128x256xf32> to vector<128xf32>
    %15 = vector.shape_cast %14 : vector<128xf32> to vector<128x1xf32>
    %16 = tpu.reciprocal %15 : vector<128x1xf32> -> vector<128x1xf32>
    %17 = vector.broadcast %16 : vector<128x1xf32> to vector<128x256xf32>
    %18 = arith.mulf %13, %17 : vector<128x256xf32>
    %c0_5 = arith.constant 0 : index
    %c0_6 = arith.constant 0 : index
    %19 = vector.load %arg14[%c0_5, %c0_6] : memref<32x256xf32, #tpu.memory_space<vmem>>, vector<32x256xf32>
    %cst_7 = arith.constant dense<0.000000e+00> : vector<32x128xf32>
    %20 = tpu.matmul %19, %18, %cst_7 {dimension_numbers = #tpu.dot_dimension_numbers<[1], [1], [0], [0], [0, 0, 1, 0], [], []>} : vector<32x256xf32>, vector<128x256xf32>, vector<32x128xf32> -> vector<32x128xf32>
    %c0_8 = arith.constant 0 : index
    %21 = memref.load %arg2[%c0_8] : memref<1xf32, #tpu.memory_space<smem>>
    %22 = vector.broadcast %21 : f32 to vector<32x128xf32>
    %23 = arith.mulf %22, %20 : vector<32x128xf32>
    %c0_9 = arith.constant 0 : index
    %c0_10 = arith.constant 0 : index
    %24 = arith.index_cast %4 : i32 to index
    %25 = vector.load %arg3[%c0_9, %c0_10, %24] : memref<1x32x256xf32, #tpu.memory_space<vmem>>, vector<1x32x128xf32>
    %26 = vector.shape_cast %25 : vector<1x32x128xf32> to vector<32x128xf32>
    %27 = arith.addf %23, %26 : vector<32x128xf32>
    %c0_11 = arith.constant 0 : index
    %c0_12 = arith.constant 0 : index
    %c0_13 = arith.constant 0 : index
    %28 = vector.load %arg10[%c0_11, %c0_12, %c0_13] : memref<1x32x128xf32, #tpu.memory_space<vmem>>, vector<1x32x128xf32>
    %29 = vector.shape_cast %28 : vector<1x32x128xf32> to vector<32x128xf32>
    %30 = vector.shape_cast %27 : vector<32x128xf32> to vector<1x32x128xf32>
    tpu.vector_store %arg10[%c0_11, %c0_12, %c0_13], %30 {strides = array<i32>} : memref<1x32x128xf32, #tpu.memory_space<vmem>>, vector<1x32x128xf32>,
    %c0_14 = arith.constant 0 : index
    %c0_15 = arith.constant 0 : index
    %c0_16 = arith.constant 0 : index
    %31 = vector.load %arg11[%c0_14, %c0_15, %c0_16] : memref<1x128x256xf32, #tpu.memory_space<vmem>>, vector<1x128x256xf32>
    %32 = vector.shape_cast %31 : vector<1x128x256xf32> to vector<128x256xf32>
    %33 = vector.shape_cast %18 : vector<128x256xf32> to vector<1x128x256xf32>
    tpu.vector_store %arg11[%c0_14, %c0_15, %c0_16], %33 {strides = array<i32>} : memref<1x128x256xf32, #tpu.memory_space<vmem>>, vector<1x128x256xf32>,
    return
  }
  func.func @transform_0(%arg0: i32, %arg1: i32) -> i32 {
    %c0_i32 = arith.constant 0 : i32
    %c0_i32_0 = arith.constant 0 : i32
    return %c0_i32 : i32
  }
  func.func @transform_1(%arg0: i32, %arg1: i32) -> (i32, i32, i32) {
    %c0_i32 = arith.constant 0 : i32
    %c0_i32_0 = arith.constant 0 : i32
    %c0_i32_1 = arith.constant 0 : i32
    return %arg0, %c0_i32, %c0_i32_0 : i32, i32, i32
  }
  func.func @transform_2(%arg0: i32, %arg1: i32) -> (i32, i32) {
    %c0_i32 = arith.constant 0 : i32
    %c0_i32_0 = arith.constant 0 : i32
    %c0_i32_1 = arith.constant 0 : i32
    return %c0_i32, %c0_i32_0 : i32, i32
  }
  func.func @transform_3(%arg0: i32, %arg1: i32) -> (i32, i32) {
    %c0_i32 = arith.constant 0 : i32
    %c0_i32_0 = arith.constant 0 : i32
    %c0_i32_1 = arith.constant 0 : i32
    return %c0_i32, %c0_i32_0 : i32, i32
  }
  func.func @transform_4(%arg0: i32, %arg1: i32) -> (i32, i32) {
    %c0_i32 = arith.constant 0 : i32
    %c0_i32_0 = arith.constant 0 : i32
    %c0_i32_1 = arith.constant 0 : i32
    return %c0_i32, %c0_i32_0 : i32, i32
  }
  func.func @transform_5(%arg0: i32, %arg1: i32) -> (i32, i32) {
    %c0_i32 = arith.constant 0 : i32
    %c0_i32_0 = arith.constant 0 : i32
    %c0_i32_1 = arith.constant 0 : i32
    return %c0_i32, %c0_i32_0 : i32, i32
  }
  func.func @transform_6(%arg0: i32, %arg1: i32) -> (i32, i32) {
    %c0_i32 = arith.constant 0 : i32
    %c0_i32_0 = arith.constant 0 : i32
    %c0_i32_1 = arith.constant 0 : i32
    return %c0_i32, %c0_i32_0 : i32, i32
  }
  func.func @transform_7(%arg0: i32, %arg1: i32) -> (i32, i32) {
    %c0_i32 = arith.constant 0 : i32
    %c0_i32_0 = arith.constant 0 : i32
    %c0_i32_1 = arith.constant 0 : i32
    return %c0_i32, %c0_i32_0 : i32, i32
  }
  func.func @transform_8(%arg0: i32, %arg1: i32) -> (i32, i32, i32) {
    %c0_i32 = arith.constant 0 : i32
    %c0_i32_0 = arith.constant 0 : i32
    return %arg0, %c0_i32, %arg1 : i32, i32, i32
  }
  func.func @transform_9(%arg0: i32, %arg1: i32) -> (i32, i32, i32) {
    %c0_i32 = arith.constant 0 : i32
    %c0_i32_0 = arith.constant 0 : i32
    return %arg0, %arg1, %c0_i32 : i32, i32, i32
  }
}

</mosaic_0001>

<llo_original>
// kernel: tpu_custom_call.1
$region0: #{tpu_custom_call.1}
  #allocation0 [shape = 'u32[]', space=smem, size = 0x4, offset = 0x4, fixed_abs, tag = 'smem constant byte address 0x4 - core index']
  #allocation1 [shape = 'u32[144,128]{1,0:T(1,128)}', space=vmem, size = 0x12000, scoped, tag = 'internal scratch']
  #allocation2 [shape = 'f32[4,256]{1,0:T(4,128)}', space=vmem, size = 0x1000, scoped, tag = 'scratch operand']
  #allocation3 [shape = 'f32[4,256]{1,0:T(4,128)}', space=vmem, size = 0x1000, scoped, tag = 'scratch operand']
  #allocation4 [shape = 'f32[32,256]{1,0:T(8,128)}', space=vmem, size = 0x8000, scoped, tag = 'scratch operand']
  #allocation5 [shape = 'f32[1]{0:T(128)S(6)}', space=smem, size = 0x200, scoped, tag = 'scoped memory for tpu_custom_call.1']
  %s0 = inlined_call_operand.<no memory space> [shape: f32[1], index: 0, kind: input, shape index: {}]
  %s1 = inlined_call_operand.hbm [shape: f32[2,32,256], index: 1, kind: input, shape index: {}]
  %s2 = inlined_call_operand.vmem [shape: f32[4,32], index: 2, kind: input, shape index: {}]
  %s3 = inlined_call_operand.vmem [shape: f32[4,1], index: 3, kind: input, shape index: {}]
  %s4 = inlined_call_operand.vmem [shape: f32[4,32], index: 4, kind: input, shape index: {}]
  %s5 = inlined_call_operand.vmem [shape: f32[4,1], index: 5, kind: input, shape index: {}]
  %s6 = inlined_call_operand.vmem [shape: f32[32,32], index: 6, kind: input, shape index: {}]
  %s7 = inlined_call_operand.vmem [shape: f32[32,1], index: 7, kind: input, shape index: {}]
  %s8 = inlined_call_operand.hbm [shape: f32[2,32,256], index: 8, kind: output, shape index: {0}]
  %s9 = inlined_call_operand.hbm [shape: f32[2,256,256], index: 9, kind: output, shape index: {1}]
  %10 = xla_tuple %s8, %s9
  %s11 = sld [smem:[#allocation0]]
  $region81: #{tpu_custom_call.1} parent=0
    _
  %s13 = ssub.s32 1, %s11
  %s14 = scalar_select 0, %s13, %s11
  %15 = sst [smem:[#allocation5]] %s0
  $region1: #{tpu_custom_call.1} parent=0
    #allocation6 [shape = 'u8[65536]{0}', space=vmem, size = 0x10000, scoped, tag = 'input window, operand 1']
    #allocation7 [shape = 's32[2]{0}', space=sflag, size = 0x8, scoped, tag = 'scoped memory for tpu_custom_call.1']
    #allocation8 [shape = 's32[2]{0}', space=sflag, size = 0x8, scoped, tag = 'scoped memory for tpu_custom_call.1']
    #allocation9 [shape = 'u8[32768]{0}', space=vmem, size = 0x8000, scoped, tag = 'output window, operand 0']
    #allocation10 [shape = 'u8[262144]{0}', space=vmem, size = 0x40000, scoped, tag = 'output window, operand 1']
    #allocation11 [shape = 's32[2]{0}', space=sflag, size = 0x8, scoped, tag = 'scoped memory for tpu_custom_call.1']
    %16 = vsyncpa [#allocation7], 0
    %s17 = scalar_lea.sflag [#allocation7], 1
    %18 = vsyncpa %s17, 0
    %19 = vsyncpa [#allocation8], 0
    %s20 = scalar_lea.sflag [#allocation8], 1
    %21 = vsyncpa %s20, 0
    %22 = vsyncpa [#allocation11], 0
    %s23 = scalar_lea.sflag [#allocation11], 1
    %24 = vsyncpa %s23, 0
    loop: start=0, step=1, limit=6
    $region2: #{tpu_custom_call.1} parent=1 // loop_pre_header
      _
    $region3: #{tpu_custom_call.1} parent=1 // loop_header
      %s26 = sphi 0, %s30
      %p27 = scmp.ge.s32.totalorder %s26, 6
      %s33 = sphi 0, %s45
      %s34 = sphi 0, %s41
      %s35 = sphi 0, %s33
      %s36 = sphi 0, %s34
      %s37 = sphi 0, %s35
      %s38 = sphi 0, %s36
      %s46 = sphi 0, %s46
      %s48 = sphi 0, %s46
      %s49 = sphi 0, %s48
      %s63 = sphi 0, %s49
      %s69 = sphi 0, %s71
      %s72 = sphi 0, %s69
      %s73 = sphi 0, %s72
      %s89 = sphi 0, %s73
      %s93 = sphi 0, %s93
      %s95 = sphi 0, %s93
      %s96 = sphi 0, %s95
      %s110 = sphi 0, %s96
      %s114 = sphi 0, %s114
      %s116 = sphi 0, %s114
      %s117 = sphi 0, %s116
      %s131 = sphi 0, %s117
      %s135 = sphi 0, %s135
      %s137 = sphi 0, %s135
      %s138 = sphi 0, %s137
      %s152 = sphi 0, %s138
      %s156 = sphi 0, %s156
      %s158 = sphi 0, %s156
      %s159 = sphi 0, %s158
      %s173 = sphi 0, %s159
      %s177 = sphi 0, %s177
      %s179 = sphi 0, %s177
      %s180 = sphi 0, %s179
      %s194 = sphi 0, %s180
      %s198 = sphi 0, %s198
      %s200 = sphi 0, %s198
      %s201 = sphi 0, %s200
      %s215 = sphi 0, %s201
      %s223 = sphi 0, %s225
      %s226 = sphi 0, %s223
      %s227 = sphi 0, %s226
      %s243 = sphi 0, %s227
      %s251 = sphi 0, %s253
      %s254 = sphi 0, %s251
      %s255 = sphi 0, %s254
      %s271 = sphi 0, %s255
    $region4: #{tpu_custom_call.1} parent=1 // loop_header_branch
      %29 = sbr.rel (%p27) target = $region8
    $region5: #{tpu_custom_call.1} parent=1 // loop_body
      %s31 = ssub.s32 %s26, 1
      %s32 = ssub.s32 %s26, 2
      %s39 = sadd.s32 1, %s34
      %p40 = scmp.ge.s32.totalorder %s39, 2
      %s41 = scalar_select %p40, 0, %s39
      %s42 = sadd.s32 1, %s33
      %s43 = scalar_select %p40, %s42, %s33
      %p44 = scmp.ge.s32.totalorder %s43, 2
      %s45 = scalar_select %p44, 0, %s43
      %s47 = sadd.s32 %s46, 1
      %p50 = scmp.eq.s32.totalorder %s26, 3
      %p51 = scmp.ne.s32.totalorder %s46, %s48
      %p52 = scmp.eq.s32.totalorder %s26, 0
      %p53 = por %p51, %p52
      %p54 = scmp.ne.s32.totalorder %s46, %s48
      %p55 = scmp.eq.s32.totalorder %s31, 3
      %p56 = por %p54, %p55
      %p57 = scmp.ne.s32.totalorder %s48, %s49
      %p58 = scmp.eq.s32.totalorder %s31, 0
      %p59 = por %p57, %p58
      %p60 = scmp.ne.s32.totalorder %s48, %s49
      %p61 = scmp.eq.s32.totalorder %s32, 3
      %p62 = por %p60, %p61
      %p64 = scmp.ne.s32.totalorder %s49, %s63
      %p65 = scmp.eq.s32.totalorder %s32, 0
      %p66 = por %p64, %p65
      %s67 = ssub.s32 %s33, %s45
      %p68 = scmp.eq.s32.totalorder %s67, 0
      %s70 = sadd.s32 %s69, 1
      %s71 = scalar_select %p68, %s69, %s70
      %p74 = pneg %p68
      %p75 = scmp.eq.s32.totalorder %s26, 3
      %p76 = por %p74, %p75
      %p77 = scmp.ne.s32.totalorder %s69, %s72
      %p78 = scmp.eq.s32.totalorder %s26, 0
      %p79 = por %p77, %p78
      %p80 = scmp.ne.s32.totalorder %s69, %s72
      %p81 = scmp.eq.s32.totalorder %s31, 3
      %p82 = por %p80, %p81
      %p83 = scmp.ne.s32.totalorder %s72, %s73
      %p84 = scmp.eq.s32.totalorder %s31, 0
      %p85 = por %p83, %p84
      %p86 = scmp.ne.s32.totalorder %s72, %s73
      %p87 = scmp.eq.s32.totalorder %s32, 3
      %p88 = por %p86, %p87
      %p90 = scmp.ne.s32.totalorder %s73, %s89
      %p91 = scmp.eq.s32.totalorder %s32, 0
      %p92 = por %p90, %p91
      %s94 = sadd.s32 %s93, 1
      %p97 = scmp.eq.s32.totalorder %s26, 3
      %p98 = scmp.ne.s32.totalorder %s93, %s95
      %p99 = scmp.eq.s32.totalorder %s26, 0
      %p100 = por %p98, %p99
      %p101 = scmp.ne.s32.totalorder %s93, %s95
      %p102 = scmp.eq.s32.totalorder %s31, 3
      %p103 = por %p101, %p102
      %p104 = scmp.ne.s32.totalorder %s95, %s96
      %p105 = scmp.eq.s32.totalorder %s31, 0
      %p106 = por %p104, %p105
      %p107 = scmp.ne.s32.totalorder %s95, %s96
      %p108 = scmp.eq.s32.totalorder %s32, 3
      %p109 = por %p107, %p108
      %p111 = scmp.ne.s32.totalorder %s96, %s110
      %p112 = scmp.eq.s32.totalorder %s32, 0
      %p113 = por %p111, %p112
      %s115 = sadd.s32 %s114, 1
      %p118 = scmp.eq.s32.totalorder %s26, 3
      %p119 = scmp.ne.s32.totalorder %s114, %s116
      %p120 = scmp.eq.s32.totalorder %s26, 0
      %p121 = por %p119, %p120
      %p122 = scmp.ne.s32.totalorder %s114, %s116
      %p123 = scmp.eq.s32.totalorder %s31, 3
      %p124 = por %p122, %p123
      %p125 = scmp.ne.s32.totalorder %s116, %s117
      %p126 = scmp.eq.s32.totalorder %s31, 0
      %p127 = por %p125, %p126
      %p128 = scmp.ne.s32.totalorder %s116, %s117
      %p129 = scmp.eq.s32.totalorder %s32, 3
      %p130 = por %p128, %p129
      %p132 = scmp.ne.s32.totalorder %s117, %s131
      %p133 = scmp.eq.s32.totalorder %s32, 0
      %p134 = por %p132, %p133
      %s136 = sadd.s32 %s135, 1
      %p139 = scmp.eq.s32.totalorder %s26, 3
      %p140 = scmp.ne.s32.totalorder %s135, %s137
      %p141 = scmp.eq.s32.totalorder %s26, 0
      %p142 = por %p140, %p141
      %p143 = scmp.ne.s32.totalorder %s135, %s137
      %p144 = scmp.eq.s32.totalorder %s31, 3
      %p145 = por %p143, %p144
      %p146 = scmp.ne.s32.totalorder %s137, %s138
      %p147 = scmp.eq.s32.totalorder %s31, 0
      %p148 = por %p146, %p147
      %p149 = scmp.ne.s32.totalorder %s137, %s138
      %p150 = scmp.eq.s32.totalorder %s32, 3
      %p151 = por %p149, %p150
      %p153 = scmp.ne.s32.totalorder %s138, %s152
      %p154 = scmp.eq.s32.totalorder %s32, 0
      %p155 = por %p153, %p154
      %s157 = sadd.s32 %s156, 1
      %p160 = scmp.eq.s32.totalorder %s26, 3
      %p161 = scmp.ne.s32.totalorder %s156, %s158
      %p162 = scmp.eq.s32.totalorder %s26, 0
      %p163 = por %p161, %p162
      %p164 = scmp.ne.s32.totalorder %s156, %s158
      %p165 = scmp.eq.s32.totalorder %s31, 3
      %p166 = por %p164, %p165
      %p167 = scmp.ne.s32.totalorder %s158, %s159
      %p168 = scmp.eq.s32.totalorder %s31, 0
      %p169 = por %p167, %p168
      %p170 = scmp.ne.s32.totalorder %s158, %s159
      %p171 = scmp.eq.s32.totalorder %s32, 3
      %p172 = por %p170, %p171
      %p174 = scmp.ne.s32.totalorder %s159, %s173
      %p175 = scmp.eq.s32.totalorder %s32, 0
      %p176 = por %p174, %p175
      %s178 = sadd.s32 %s177, 1
      %p181 = scmp.eq.s32.totalorder %s26, 3
      %p182 = scmp.ne.s32.totalorder %s177, %s179
      %p183 = scmp.eq.s32.totalorder %s26, 0
      %p184 = por %p182, %p183
      %p185 = scmp.ne.s32.totalorder %s177, %s179
      %p186 = scmp.eq.s32.totalorder %s31, 3
      %p187 = por %p185, %p186
      %p188 = scmp.ne.s32.totalorder %s179, %s180
      %p189 = scmp.eq.s32.totalorder %s31, 0
      %p190 = por %p188, %p189
      %p191 = scmp.ne.s32.totalorder %s179, %s180
      %p192 = scmp.eq.s32.totalorder %s32, 3
      %p193 = por %p191, %p192
      %p195 = scmp.ne.s32.totalorder %s180, %s194
      %p196 = scmp.eq.s32.totalorder %s32, 0
      %p197 = por %p195, %p196
      %s199 = sadd.s32 %s198, 1
      %p202 = scmp.eq.s32.totalorder %s26, 3
      %p203 = scmp.ne.s32.totalorder %s198, %s200
      %p204 = scmp.eq.s32.totalorder %s26, 0
      %p205 = por %p203, %p204
      %p206 = scmp.ne.s32.totalorder %s198, %s200
      %p207 = scmp.eq.s32.totalorder %s31, 3
      %p208 = por %p206, %p207
      %p209 = scmp.ne.s32.totalorder %s200, %s201
      %p210 = scmp.eq.s32.totalorder %s31, 0
      %p211 = por %p209, %p210
      %p212 = scmp.ne.s32.totalorder %s200, %s201
      %p213 = scmp.eq.s32.totalorder %s32, 3
      %p214 = por %p212, %p213
      %p216 = scmp.ne.s32.totalorder %s201, %s215
      %p217 = scmp.eq.s32.totalorder %s32, 0
      %p218 = por %p216, %p217
      %s219 = ssub.s32 %s33, %s45
      %s220 = ssub.s32 %s34, %s41
      %s221 = sor.u32 %s219, %s220
      %p222 = scmp.eq.s32.totalorder %s221, 0
      %s224 = sadd.s32 %s223, 1
      %s225 = scalar_select %p222, %s223, %s224
      %p228 = pneg %p222
      %p229 = scmp.eq.s32.totalorder %s26, 3
      %p230 = por %p228, %p229
      %p231 = scmp.ne.s32.totalorder %s223, %s226
      %p232 = scmp.eq.s32.totalorder %s26, 0
      %p233 = por %p231, %p232
      %p234 = scmp.ne.s32.totalorder %s223, %s226
      %p235 = scmp.eq.s32.totalorder %s31, 3
      %p236 = por %p234, %p235
      %p237 = scmp.ne.s32.totalorder %s226, %s227
      %p238 = scmp.eq.s32.totalorder %s31, 0
      %p239 = por %p237, %p238
      %p240 = scmp.ne.s32.totalorder %s226, %s227
      %p241 = scmp.eq.s32.totalorder %s32, 3
      %p242 = por %p240, %p241
      %p244 = scmp.ne.s32.totalorder %s227, %s243
      %p245 = scmp.eq.s32.totalorder %s32, 0
      %p246 = por %p244, %p245
      %s247 = ssub.s32 %s33, %s45
      %s248 = ssub.s32 %s34, %s41
      %s249 = sor.u32 %s247, %s248
      %p250 = scmp.eq.s32.totalorder %s249, 0
      %s252 = sadd.s32 %s251, 1
      %s253 = scalar_select %p250, %s251, %s252
      %p256 = pneg %p250
      %p257 = scmp.eq.s32.totalorder %s26, 3
      %p258 = por %p256, %p257
      %p259 = scmp.ne.s32.totalorder %s251, %s254
      %p260 = scmp.eq.s32.totalorder %s26, 0
      %p261 = por %p259, %p260
      %p262 = scmp.ne.s32.totalorder %s251, %s254
      %p263 = scmp.eq.s32.totalorder %s31, 3
      %p264 = por %p262, %p263
      %p265 = scmp.ne.s32.totalorder %s254, %s255
      %p266 = scmp.eq.s32.totalorder %s31, 0
      %p267 = por %p265, %p266
      %p268 = scmp.ne.s32.totalorder %s254, %s255
      %p269 = scmp.eq.s32.totalorder %s32, 3
      %p270 = por %p268, %p269
      %p272 = scmp.ne.s32.totalorder %s255, %s271
      %p273 = scmp.eq.s32.totalorder %s32, 0
      %p274 = por %p272, %p273
      %p275 = scmp.le.s32.totalorder 1, %s26
      %p276 = scmp.lt.s32.totalorder %s26, 5
      %p277 = pnand %p275, %p276
      %p278 = pneg %p277
      // Predicated region
      $region9: #{tpu_custom_call.1} parent=5 // pred_check
        _
      $region10: #{tpu_custom_call.1} parent=5 // pred_check_branch
        %280 = sbr.rel (%p277) target = $region12
      $region11: #{tpu_custom_call.1} parent=5 // pred_region
        %s281 = ssub.s32 %s26, 1
        // Predicated region
        $region13: #{tpu_custom_call.1} parent=11 // pred_check
          %p282 = pneg %p59
        $region14: #{tpu_custom_call.1} parent=11 // pred_check_branch
          %284 = sbr.rel (%p282) target = $region16
        $region15: #{tpu_custom_call.1} parent=11 // pred_region
          _
        $region16: #{tpu_custom_call.1} parent=11 // pred_fallthru
          _
        // Predicated region
        $region17: #{tpu_custom_call.1} parent=11 // pred_check
          %p285 = pneg %p106
        $region18: #{tpu_custom_call.1} parent=11 // pred_check_branch
          %287 = sbr.rel (%p285) target = $region20
        $region19: #{tpu_custom_call.1} parent=11 // pred_region
          _
        $region20: #{tpu_custom_call.1} parent=11 // pred_fallthru
          _
        // Predicated region
        $region21: #{tpu_custom_call.1} parent=11 // pred_check
          %p288 = pneg %p127
        $region22: #{tpu_custom_call.1} parent=11 // pred_check_branch
          %290 = sbr.rel (%p288) target = $region24
        $region23: #{tpu_custom_call.1} parent=11 // pred_region
          _
        $region24: #{tpu_custom_call.1} parent=11 // pred_fallthru
          _
        // Predicated region
        $region25: #{tpu_custom_call.1} parent=11 // pred_check
          %p291 = pneg %p148
        $region26: #{tpu_custom_call.1} parent=11 // pred_check_branch
          %293 = sbr.rel (%p291) target = $region28
        $region27: #{tpu_custom_call.1} parent=11 // pred_region
          _
        $region28: #{tpu_custom_call.1} parent=11 // pred_fallthru
          _
        // Predicated region
        $region29: #{tpu_custom_call.1} parent=11 // pred_check
          %p294 = pneg %p169
        $region30: #{tpu_custom_call.1} parent=11 // pred_check_branch
          %296 = sbr.rel (%p294) target = $region32
        $region31: #{tpu_custom_call.1} parent=11 // pred_region
          _
        $region32: #{tpu_custom_call.1} parent=11 // pred_fallthru
          _
        // Predicated region
        $region33: #{tpu_custom_call.1} parent=11 // pred_check
          %p297 = pneg %p190
        $region34: #{tpu_custom_call.1} parent=11 // pred_check_branch
          %299 = sbr.rel (%p297) target = $region36
        $region35: #{tpu_custom_call.1} parent=11 // pred_region
          _
        $region36: #{tpu_custom_call.1} parent=11 // pred_fallthru
          _
        // Predicated region
        $region37: #{tpu_custom_call.1} parent=11 // pred_check
          %p300 = pneg %p211
        $region38: #{tpu_custom_call.1} parent=11 // pred_check_branch
          %302 = sbr.rel (%p300) target = $region40
        $region39: #{tpu_custom_call.1} parent=11 // pred_region
          _
        $region40: #{tpu_custom_call.1} parent=11 // pred_fallthru
          _
      $region12: #{tpu_custom_call.1} parent=5 // pred_fallthru
        _
      %p303 = scmp.lt.s32.totalorder %s26, 4
      // Predicated region
      $region41: #{tpu_custom_call.1} parent=5 // pred_check
        %p304 = pneg %p303
      $region42: #{tpu_custom_call.1} parent=5 // pred_check_branch
        %306 = sbr.rel (%p304) target = $region44
      $region43: #{tpu_custom_call.1} parent=5 // pred_region
        // Predicated region
        $region45: #{tpu_custom_call.1} parent=43 // pred_check
          %p307 = pneg %p79
        $region46: #{tpu_custom_call.1} parent=43 // pred_check_branch
          %309 = sbr.rel (%p307) target = $region48
        $region47: #{tpu_custom_call.1} parent=43 // pred_region
          %s310 = sand.u32 %s69, 1
          %s311 = scalar_lea.sflag [#allocation7], %s310
          %s312 = sand.u32 %s69, 1
          %s313 = smul.addr %s312, 64
          %s314 = scalar_lea.vmem [#allocation6], %s313
          %s316 = ssub.s32 1024, 1024
          %317 = vsyncadd %s311, %s316
          %s318 = smul.addr %s33, 8
          %s319 = smul.addr %s318, 128
          %s320 = scalar_lea.hbm %s1, %s319
          %s321 = sshll.u32 %s314, 4
          %s322 = int_to_ptr.vmem [resolvable:$true] %s321
          %327 = dma.hbm_to_vmem [thread:$0]  %s320, 1024, %s322, %s311, 256, 256, 16
        $region48: #{tpu_custom_call.1} parent=43 // pred_fallthru
          _
      $region44: #{tpu_custom_call.1} parent=5 // pred_fallthru
        _
      %p328 = scmp.le.s32.totalorder 1, %s26
      %p329 = scmp.lt.s32.totalorder %s26, 5
      %p330 = pnand %p328, %p329
      %p331 = pneg %p330
      // Predicated region
      $region49: #{tpu_custom_call.1} parent=5 // pred_check
        _
      $region50: #{tpu_custom_call.1} parent=5 // pred_check_branch
        %333 = sbr.rel (%p330) target = $region52
      $region51: #{tpu_custom_call.1} parent=5 // pred_region
        %s334 = ssub.s32 %s26, 1
        %s335 = sand.u32 %s72, 1
        %s336 = scalar_lea.sflag [#allocation7], %s335
        %s337 = sand.u32 %s72, 1
        %s338 = smul.addr %s337, 64
        %s339 = scalar_lea.vmem [#allocation6], %s338
        // Predicated region
        $region53: #{tpu_custom_call.1} parent=51 // pred_check
          %p340 = pneg %p85
        $region54: #{tpu_custom_call.1} parent=51 // pred_check_branch
          %342 = sbr.rel (%p340) target = $region56
        $region55: #{tpu_custom_call.1} parent=51 // pred_region
          %343 = dma.done %s336, 1024
        $region56: #{tpu_custom_call.1} parent=51 // pred_fallthru
          _
        %p344 = pneg %p59
        %p345 = pneg %p56
        %s346 = sand.u32 %s72, 1
        %s347 = scalar_lea.sflag [#allocation7], %s346
        %s348 = sand.u32 %s72, 1
        %s349 = smul.addr %s348, 64
        %s350 = scalar_lea.vmem [#allocation6], %s349
        %p351 = pneg %p85
        %p352 = pneg %p82
        %p353 = pneg %p106
        %p354 = pneg %p103
        %p355 = pneg %p127
        %p356 = pneg %p124
        %p357 = pneg %p148
        %p358 = pneg %p145
        %p359 = pneg %p169
        %p360 = pneg %p166
        %p361 = pneg %p190
        %p362 = pneg %p187
        %p363 = pneg %p211
        %p364 = pneg %p208
        %p365 = pneg %p239
        %p366 = pneg %p236
        %s367 = sand.u32 %s226, 1
        %s368 = scalar_lea.sflag [#allocation8], %s367
        %s369 = sand.u32 %s226, 1
        %s370 = smul.addr %s369, 32
        %s371 = scalar_lea.vmem [#allocation9], %s370
        %p372 = pneg %p267
        %p373 = pneg %p264
        %s374 = sand.u32 %s254, 1
        %s375 = scalar_lea.sflag [#allocation11], %s374
        %s376 = sand.u32 %s254, 1
        %s377 = smul.addr %s376, 256
        %s378 = scalar_lea.vmem [#allocation10], %s377
        %s379 = smul.u32 16, %s36
        %p380 = scmp.eq.s32.totalorder %s36, 0
        // Predicated region
        $region57: #{tpu_custom_call.1} parent=51 // pred_check
          %p381 = pneg %p380
        $region58: #{tpu_custom_call.1} parent=51 // pred_check_branch
          %383 = sbr.rel (%p381) target = $region60
        $region59: #{tpu_custom_call.1} parent=51 // pred_region
          %v384 = vld [vmem:[%s339] sm:$0xff]
          %v385 = vld [vmem:[%s339 + $0x8] sm:$0xff]
          %v386 = vld [vmem:[%s339 + $0x10] sm:$0xff]
          %v387 = vld [vmem:[%s339 + $0x18] sm:$0xff]
          %v388 = vld [vmem:[%s339 + $0x20] sm:$0xff]
          %v389 = vld [vmem:[%s339 + $0x28] sm:$0xff]
          %v390 = vld [vmem:[%s339 + $0x30] sm:$0xff]
          %v391 = vld [vmem:[%s339 + $0x38] sm:$0xff]
          %v392 = vld [vmem:[%s2] sm:$0xf]
          %v393 = vld [vmem:[%s4] sm:$0xf]
          %v394 = vld [vmem:[%s6] sm:$0xff]
          %v395 = vld [vmem:[%s6 + $0x8] sm:$0xff]
          %v396 = vld [vmem:[%s6 + $0x10] sm:$0xff]
          %v397 = vld [vmem:[%s6 + $0x18] sm:$0xff]
          %v398 = vld [vmem:[%s3] sm:$0xf]
          %400 = vset.pattern.permute.xlu0 0
          %401 = vperm.xlu0 %400, %v398
          %v402 = vpop.permute.xlu0 %401
          %vm404 = vcmask 261120
          %v406 = vsel %vm404, %v392, 0
          %408 = vmatprep.subr.mxu0 %v385
          %409 = vmatpush1.msra.mxu0 %v384
          %410 = vmatprep.subr.mxu0 %v387
          %411 = vmatpush1.msra.mxu0 %v386
          %412 = vmatprep.subr.mxu0 %v389
          %413 = vmatpush1.msra.mxu0 %v388
          %414 = vmatprep.subr.mxu0 %v391
          %415 = vmatpush1.msra.mxu0 %v390
          %416 = vmatprep.subr.mxu0 0.0
          %417 = vmatpush1.msra.mxu0 0.0
          %418 = vmatprep.subr.mxu0 0.0
          %419 = vmatpush1.msra.mxu0 0.0
          %420 = vmatprep.subr.mxu0 0.0
          %421 = vmatpush1.msra.mxu0 0.0
          %422 = vmatprep.subr.mxu0 0.0
          %423 = vmatpush1.msra.mxu0 0.0
          %424 = vmatprep.subr.mxu0 0.0
          %425 = vmatpush1.msra.mxu0 0.0
          %426 = vmatprep.subr.mxu0 0.0
          %427 = vmatpush1.msra.mxu0 0.0
          %428 = vmatprep.subr.mxu0 0.0
          %429 = vmatpush1.msra.mxu0 0.0
          %430 = vmatprep.subr.mxu0 0.0
          %431 = vmatpush1.msra.mxu0 0.0
          %432 = vmatprep.subr.mxu0 0.0
          %433 = vmatpush1.msra.mxu0 0.0
          %434 = vmatprep.subr.mxu0 0.0
          %435 = vmatpush1.msra.mxu0 0.0
          %436 = vmatprep.subr.mxu0 0.0
          %437 = vmatpush1.msra.mxu0 0.0
          %438 = vmatprep.subr.mxu0 0.0
          %439 = vmatpush1.msra.mxu0 0.0
          %440 = vmatprep.subr.mxu0 0.0
          %441 = vmatpush1.msra.mxu0 0.0
          %442 = vmatprep.subr.mxu0 0.0
          %443 = vmatpush1.msra.mxu0 0.0
          %444 = vmatprep.subr.mxu0 0.0
          %445 = vmatpush1.msra.mxu0 0.0
          %446 = vmatprep.subr.mxu0 0.0
          %447 = vmatpush1.msra.mxu0 0.0
          %448 = vmatprep.subr.mxu0 0.0
          %449 = vmatpush1.msra.mxu0 0.0
          %450 = vmatprep.subr.mxu0 0.0
          %451 = vmatpush1.msra.mxu0 0.0
          %452 = vmatprep.subr.mxu0 0.0
          %453 = vmatpush1.msra.mxu0 0.0
          %454 = vmatprep.subr.mxu0 0.0
          %455 = vmatpush1.msra.mxu0 0.0
          %456 = vmatprep.subr.mxu0 0.0
          %457 = vmatpush1.msra.mxu0 0.0
          %458 = vmatprep.subr.mxu0 0.0
          %459 = vmatpush1.msra.mxu0 0.0
          %460 = vmatprep.subr.mxu0 0.0
          %461 = vmatpush1.msra.mxu0 0.0
          %462 = vmatprep.subr.mxu0 0.0
          %463 = vmatpush1.msra.mxu0 0.0
          %464 = vmatprep.subr.mxu0 0.0
          %465 = vmatpush1.msra.mxu0 0.0
          %466 = vmatprep.subr.mxu0 0.0
          %467 = vmatpush1.msra.mxu0 0.0
          %468 = vmatprep.subr.mxu0 0.0
          %469 = vmatpush1.msra.mxu0 0.0
          %470 = vmatprep.subr.mxu0 0.0
          %471 = vmatpush1.msra.mxu0 0.0
          %472 = vmatprep.mubr.f32.mxu0 0.0
          %473 = vmatmul.mubr.f32.gmra.mrb[0].mxu0 %v406
          %v474 = vpop.f32.mrb[0].mxu0
          %v475 = vadd.f32 %v402, %v474
          %v476 = vpop.f32.mrb[0].mxu0
          %v477 = vadd.f32 %v402, %v476
          %478 = vdwg.mxu0
          %v479 = vld [vmem:[%s5] sm:$0xf]
          %481 = vset.pattern.permute.xlu0 0
          %482 = vperm.xlu0 %481, %v479
          %v483 = vpop.permute.xlu0 %482
          %v486 = vsel %vm404, %v393, 0
          %488 = vmatprep.subr.mxu0 %v385
          %489 = vmatpush1.msra.mxu0 %v384
          %490 = vmatprep.subr.mxu0 %v387
          %491 = vmatpush1.msra.mxu0 %v386
          %492 = vmatprep.subr.mxu0 %v389
          %493 = vmatpush1.msra.mxu0 %v388
          %494 = vmatprep.subr.mxu0 %v391
          %495 = vmatpush1.msra.mxu0 %v390
          %496 = vmatprep.subr.mxu0 0.0
          %497 = vmatpush1.msra.mxu0 0.0
          %498 = vmatprep.subr.mxu0 0.0
          %499 = vmatpush1.msra.mxu0 0.0
          %500 = vmatprep.subr.mxu0 0.0
          %501 = vmatpush1.msra.mxu0 0.0
          %502 = vmatprep.subr.mxu0 0.0
          %503 = vmatpush1.msra.mxu0 0.0
          %504 = vmatprep.subr.mxu0 0.0
          %505 = vmatpush1.msra.mxu0 0.0
          %506 = vmatprep.subr.mxu0 0.0
          %507 = vmatpush1.msra.mxu0 0.0
          %508 = vmatprep.subr.mxu0 0.0
          %509 = vmatpush1.msra.mxu0 0.0
          %510 = vmatprep.subr.mxu0 0.0
          %511 = vmatpush1.msra.mxu0 0.0
          %512 = vmatprep.subr.mxu0 0.0
          %513 = vmatpush1.msra.mxu0 0.0
          %514 = vmatprep.subr.mxu0 0.0
          %515 = vmatpush1.msra.mxu0 0.0
          %516 = vmatprep.subr.mxu0 0.0
          %517 = vmatpush1.msra.mxu0 0.0
          %518 = vmatprep.subr.mxu0 0.0
          %519 = vmatpush1.msra.mxu0 0.0
          %520 = vmatprep.subr.mxu0 0.0
          %521 = vmatpush1.msra.mxu0 0.0
          %522 = vmatprep.subr.mxu0 0.0
          %523 = vmatpush1.msra.mxu0 0.0
          %524 = vmatprep.subr.mxu0 0.0
          %525 = vmatpush1.msra.mxu0 0.0
          %526 = vmatprep.subr.mxu0 0.0
          %527 = vmatpush1.msra.mxu0 0.0
          %528 = vmatprep.subr.mxu0 0.0
          %529 = vmatpush1.msra.mxu0 0.0
          %530 = vmatprep.subr.mxu0 0.0
          %531 = vmatpush1.msra.mxu0 0.0
          %532 = vmatprep.subr.mxu0 0.0
          %533 = vmatpush1.msra.mxu0 0.0
          %534 = vmatprep.subr.mxu0 0.0
          %535 = vmatpush1.msra.mxu0 0.0
          %536 = vmatprep.subr.mxu0 0.0
          %537 = vmatpush1.msra.mxu0 0.0
          %538 = vmatprep.subr.mxu0 0.0
          %539 = vmatpush1.msra.mxu0 0.0
          %540 = vmatprep.subr.mxu0 0.0
          %541 = vmatpush1.msra.mxu0 0.0
          %542 = vmatprep.subr.mxu0 0.0
          %543 = vmatpush1.msra.mxu0 0.0
          %544 = vmatprep.subr.mxu0 0.0
          %545 = vmatpush1.msra.mxu0 0.0
          %546 = vmatprep.subr.mxu0 0.0
          %547 = vmatpush1.msra.mxu0 0.0
          %548 = vmatprep.subr.mxu0 0.0
          %549 = vmatpush1.msra.mxu0 0.0
          %550 = vmatprep.subr.mxu0 0.0
          %551 = vmatpush1.msra.mxu0 0.0
          %552 = vmatprep.mubr.f32.mxu0 0.0
          %553 = vmatmul.mubr.f32.gmra.mrb[0].mxu0 %v486
          %v554 = vpop.f32.mrb[0].mxu0
          %v555 = vadd.f32 %v483, %v554
          %v556 = vpop.f32.mrb[0].mxu0
          %v557 = vadd.f32 %v483, %v556
          %558 = vdwg.mxu0
          %v559 = vld [vmem:[%s7] sm:$0xff]
          %v560 = vld [vmem:[%s7 + $0x8] sm:$0xff]
          %v561 = vld [vmem:[%s7 + $0x10] sm:$0xff]
          %v562 = vld [vmem:[%s7 + $0x18] sm:$0xff]
          %564 = vset.pattern.permute.xlu0 0
          %565 = vperm.xlu0 %564, %v559
          %v566 = vpop.permute.xlu0 %565
          %569 = vset.pattern.permute.xlu0 0
          %570 = vperm.xlu0 %569, %v560
          %v571 = vpop.permute.xlu0 %570
          %574 = vset.pattern.permute.xlu0 0
          %575 = vperm.xlu0 %574, %v561
          %v576 = vpop.permute.xlu0 %575
          %579 = vset.pattern.permute.xlu0 0
          %580 = vperm.xlu0 %579, %v562
          %v581 = vpop.permute.xlu0 %580
          %v584 = vsel %vm404, %v394, 0
          %v587 = vsel %vm404, %v395, 0
          %v590 = vsel %vm404, %v396, 0
          %v593 = vsel %vm404, %v397, 0
          %595 = vmatprep.subr.mxu0 %v385
          %596 = vmatpush1.msra.mxu0 %v384
          %597 = vmatprep.subr.mxu0 %v387
          %598 = vmatpush1.msra.mxu0 %v386
          %599 = vmatprep.subr.mxu0 %v389
          %600 = vmatpush1.msra.mxu0 %v388
          %601 = vmatprep.subr.mxu0 %v391
          %602 = vmatpush1.msra.mxu0 %v390
          %603 = vmatprep.subr.mxu0 0.0
          %604 = vmatpush1.msra.mxu0 0.0
          %605 = vmatprep.subr.mxu0 0.0
          %606 = vmatpush1.msra.mxu0 0.0
          %607 = vmatprep.subr.mxu0 0.0
          %608 = vmatpush1.msra.mxu0 0.0
          %609 = vmatprep.subr.mxu0 0.0
          %610 = vmatpush1.msra.mxu0 0.0
          %611 = vmatprep.subr.mxu0 0.0
          %612 = vmatpush1.msra.mxu0 0.0
          %613 = vmatprep.subr.mxu0 0.0
          %614 = vmatpush1.msra.mxu0 0.0
          %615 = vmatprep.subr.mxu0 0.0
          %616 = vmatpush1.msra.mxu0 0.0
          %617 = vmatprep.subr.mxu0 0.0
          %618 = vmatpush1.msra.mxu0 0.0
          %619 = vmatprep.subr.mxu0 0.0
          %620 = vmatpush1.msra.mxu0 0.0
          %621 = vmatprep.subr.mxu0 0.0
          %622 = vmatpush1.msra.mxu0 0.0
          %623 = vmatprep.subr.mxu0 0.0
          %624 = vmatpush1.msra.mxu0 0.0
          %625 = vmatprep.subr.mxu0 0.0
          %626 = vmatpush1.msra.mxu0 0.0
          %627 = vmatprep.subr.mxu0 0.0
          %628 = vmatpush1.msra.mxu0 0.0
          %629 = vmatprep.subr.mxu0 0.0
          %630 = vmatpush1.msra.mxu0 0.0
          %631 = vmatprep.subr.mxu0 0.0
          %632 = vmatpush1.msra.mxu0 0.0
          %633 = vmatprep.subr.mxu0 0.0
          %634 = vmatpush1.msra.mxu0 0.0
          %635 = vmatprep.subr.mxu0 0.0
          %636 = vmatpush1.msra.mxu0 0.0
          %637 = vmatprep.subr.mxu0 0.0
          %638 = vmatpush1.msra.mxu0 0.0
          %639 = vmatprep.subr.mxu0 0.0
          %640 = vmatpush1.msra.mxu0 0.0
          %641 = vmatprep.subr.mxu0 0.0
          %642 = vmatpush1.msra.mxu0 0.0
          %643 = vmatprep.subr.mxu0 0.0
          %644 = vmatpush1.msra.mxu0 0.0
          %645 = vmatprep.subr.mxu0 0.0
          %646 = vmatpush1.msra.mxu0 0.0
          %647 = vmatprep.subr.mxu0 0.0
          %648 = vmatpush1.msra.mxu0 0.0
          %649 = vmatprep.subr.mxu0 0.0
          %650 = vmatpush1.msra.mxu0 0.0
          %651 = vmatprep.subr.mxu0 0.0
          %652 = vmatpush1.msra.mxu0 0.0
          %653 = vmatprep.subr.mxu0 0.0
          %654 = vmatpush1.msra.mxu0 0.0
          %655 = vmatprep.subr.mxu0 0.0
          %656 = vmatpush1.msra.mxu0 0.0
          %657 = vmatprep.subr.mxu0 0.0
          %658 = vmatpush1.msra.mxu0 0.0
          %659 = vmatprep.mubr.f32.mxu0 0.0
          %660 = vmatmul.mubr.f32.gmra.mrb[0].mxu0 %v584
          %v661 = vpop.f32.mrb[0].mxu0
          %v662 = vadd.f32 %v566, %v661
          %v663 = vpop.f32.mrb[0].mxu0
          %v664 = vadd.f32 %v566, %v663
          %665 = vmatprep.mubr.f32.mxu0 0.0
          %666 = vmatmul.mubr.f32.gmra.mrb[0].mxu0 %v587
          %v667 = vpop.f32.mrb[0].mxu0
          %v668 = vadd.f32 %v571, %v667
          %v669 = vpop.f32.mrb[0].mxu0
          %v670 = vadd.f32 %v571, %v669
          %671 = vmatprep.mubr.f32.mxu0 0.0
          %672 = vmatmul.mubr.f32.gmra.mrb[0].mxu0 %v590
          %v673 = vpop.f32.mrb[0].mxu0
          %v674 = vadd.f32 %v576, %v673
          %v675 = vpop.f32.mrb[0].mxu0
          %v676 = vadd.f32 %v576, %v675
          %677 = vmatprep.mubr.f32.mxu0 0.0
          %678 = vmatmul.mubr.f32.gmra.mrb[0].mxu0 %v593
          %v679 = vpop.f32.mrb[0].mxu0
          %v680 = vadd.f32 %v581, %v679
          %v681 = vpop.f32.mrb[0].mxu0
          %v682 = vadd.f32 %v581, %v681
          %683 = vdwg.mxu0
          %v686 = vcombine.low %v475, %v477
          %688 = vst [vmem:[#allocation2] sm:$0xff] %v686
          %v691 = vcombine.low %v555, %v557
          %693 = vst [vmem:[#allocation3] sm:$0xff] %v691
          %694 = vst [vmem:[#allocation4] sm:$0xff] %v662
          %695 = vst [vmem:[#allocation4 + $0x8] sm:$0xff] %v664
          %696 = vst [vmem:[#allocation4 + $0x10] sm:$0xff] %v668
          %697 = vst [vmem:[#allocation4 + $0x18] sm:$0xff] %v670
          %698 = vst [vmem:[#allocation4 + $0x20] sm:$0xff] %v674
          %699 = vst [vmem:[#allocation4 + $0x28] sm:$0xff] %v676
          %700 = vst [vmem:[#allocation4 + $0x30] sm:$0xff] %v680
          %701 = vst [vmem:[#allocation4 + $0x38] sm:$0xff] %v682
        $region60: #{tpu_custom_call.1} parent=51 // pred_fallthru
          _
        %s702 = smul.u32 %s36, 128
        %s703 = sshra.s32 %s702, 7
        %s704 = sand.u32 %s702, 127
        %s705 = smul.addr %s703, 4
        %s706 = scalar_lea.vmem [#allocation2], %s705
        %v707 = vld [vmem:[%s706] sm:$0xf]
        %v708 = vld [vmem:[#allocation3] sm:$0xff]
        %709 = vxpose.xlu0.b32.start [1/16] %v707, 128
        %710 = vxpose.xlu0.b32.cont [2/16] 0.0, 128
        %711 = vxpose.xlu0.b32.cont [3/16] 0.0, 128
        %712 = vxpose.xlu0.b32.cont [4/16] 0.0, 128
        %713 = vxpose.xlu0.b32.cont [5/16] 0.0, 128
        %714 = vxpose.xlu0.b32.cont [6/16] 0.0, 128
        %715 = vxpose.xlu0.b32.cont [7/16] 0.0, 128
        %716 = vxpose.xlu0.b32.cont [8/16] 0.0, 128
        %717 = vxpose.xlu0.b32.cont [9/16] 0.0, 128
        %718 = vxpose.xlu0.b32.cont [10/16] 0.0, 128
        %719 = vxpose.xlu0.b32.cont [11/16] 0.0, 128
        %720 = vxpose.xlu0.b32.cont [12/16] 0.0, 128
        %721 = vxpose.xlu0.b32.cont [13/16] 0.0, 128
        %722 = vxpose.xlu0.b32.cont [14/16] 0.0, 128
        %723 = vxpose.xlu0.b32.cont [15/16] 0.0, 128
        %724 = vxpose.xlu0.b32.end [16/16] 0.0, 128
        %v725 = vpop.trf.xlu0
        %v726 = vpop.trf.xlu0
        %v727 = vpop.trf.xlu0
        %v728 = vpop.trf.xlu0
        %v729 = vpop.trf.xlu0
        %v730 = vpop.trf.xlu0
        %v731 = vpop.trf.xlu0
        %v732 = vpop.trf.xlu0
        %v733 = vpop.trf.xlu0
        %v734 = vpop.trf.xlu0
        %v735 = vpop.trf.xlu0
        %v736 = vpop.trf.xlu0
        %v737 = vpop.trf.xlu0
        %v738 = vpop.trf.xlu0
        %v739 = vpop.trf.xlu0
        %v740 = vpop.trf.xlu0
        %v742 = vcombine.high %v708, %v708
        %vm743 = vcmask 31744
        %v745 = vsel %vm743, %v725, 0
        %v748 = vsel %vm743, %v726, 0
        %v751 = vsel %vm743, %v727, 0
        %v754 = vsel %vm743, %v728, 0
        %v757 = vsel %vm743, %v729, 0
        %v760 = vsel %vm743, %v730, 0
        %v763 = vsel %vm743, %v731, 0
        %v766 = vsel %vm743, %v732, 0
        %v769 = vsel %vm743, %v733, 0
        %v772 = vsel %vm743, %v734, 0
        %v775 = vsel %vm743, %v735, 0
        %v778 = vsel %vm743, %v736, 0
        %v781 = vsel %vm743, %v737, 0
        %v784 = vsel %vm743, %v738, 0
        %v787 = vsel %vm743, %v739, 0
        %v790 = vsel %vm743, %v740, 0
        %vm792 = vcmask 1043456
        %v793 = vsel %vm792, %v708, 0
        %v795 = vsel %vm792, %v742, 0
        %797 = vmatprep.subr.mxu0 %v795
        %798 = vmatpush1.msra.mxu0 %v793
        %799 = vmatprep.subr.mxu0 0.0
        %800 = vmatpush1.msra.mxu0 0.0
        %801 = vmatprep.subr.mxu0 0.0
        %802 = vmatpush1.msra.mxu0 0.0
        %803 = vmatprep.subr.mxu0 0.0
        %804 = vmatpush1.msra.mxu0 0.0
        %805 = vmatprep.subr.mxu0 0.0
        %806 = vmatpush1.msra.mxu0 0.0
        %807 = vmatprep.subr.mxu0 0.0
        %808 = vmatpush1.msra.mxu0 0.0
        %809 = vmatprep.subr.mxu0 0.0
        %810 = vmatpush1.msra.mxu0 0.0
        %811 = vmatprep.subr.mxu0 0.0
        %812 = vmatpush1.msra.mxu0 0.0
        %813 = vmatprep.subr.mxu0 0.0
        %814 = vmatpush1.msra.mxu0 0.0
        %815 = vmatprep.subr.mxu0 0.0
        %816 = vmatpush1.msra.mxu0 0.0
        %817 = vmatprep.subr.mxu0 0.0
        %818 = vmatpush1.msra.mxu0 0.0
        %819 = vmatprep.subr.mxu0 0.0
        %820 = vmatpush1.msra.mxu0 0.0
        %821 = vmatprep.subr.mxu0 0.0
        %822 = vmatpush1.msra.mxu0 0.0
        %823 = vmatprep.subr.mxu0 0.0
        %824 = vmatpush1.msra.mxu0 0.0
        %825 = vmatprep.subr.mxu0 0.0
        %826 = vmatpush1.msra.mxu0 0.0
        %827 = vmatprep.subr.mxu0 0.0
        %828 = vmatpush1.msra.mxu0 0.0
        %829 = vmatprep.subr.mxu0 0.0
        %830 = vmatpush1.msra.mxu0 0.0
        %831 = vmatprep.subr.mxu0 0.0
        %832 = vmatpush1.msra.mxu0 0.0
        %833 = vmatprep.subr.mxu0 0.0
        %834 = vmatpush1.msra.mxu0 0.0
        %835 = vmatprep.subr.mxu0 0.0
        %836 = vmatpush1.msra.mxu0 0.0
        %837 = vmatprep.subr.mxu0 0.0
        %838 = vmatpush1.msra.mxu0 0.0
        %839 = vmatprep.subr.mxu0 0.0
        %840 = vmatpush1.msra.mxu0 0.0
        %841 = vmatprep.subr.mxu0 0.0
        %842 = vmatpush1.msra.mxu0 0.0
        %843 = vmatprep.subr.mxu0 0.0
        %844 = vmatpush1.msra.mxu0 0.0
        %845 = vmatprep.subr.mxu0 0.0
        %846 = vmatpush1.msra.mxu0 0.0
        %847 = vmatprep.subr.mxu0 0.0
        %848 = vmatpush1.msra.mxu0 0.0
        %849 = vmatprep.subr.mxu0 0.0
        %850 = vmatpush1.msra.mxu0 0.0
        %851 = vmatprep.subr.mxu0 0.0
        %852 = vmatpush1.msra.mxu0 0.0
        %853 = vmatprep.subr.mxu0 0.0
        %854 = vmatpush1.msra.mxu0 0.0
        %855 = vmatprep.subr.mxu0 0.0
        %856 = vmatpush1.msra.mxu0 0.0
        %857 = vmatprep.subr.mxu0 0.0
        %858 = vmatpush1.msra.mxu0 0.0
        %859 = vmatprep.subr.mxu0 0.0
        %860 = vmatpush1.msra.mxu0 0.0
        %861 = vmatprep.mubr.f32.mxu0 0.0
        %862 = vmatmul.mubr.f32.gmra.mrb[0].mxu0 %v745
        %v863 = vpop.f32.mrb[0].mxu0
        %v864 = vadd.f32 0.0, %v863
        %v865 = vpop.f32.mrb[0].mxu0
        %v866 = vadd.f32 0.0, %v865
        %867 = vmatprep.mubr.f32.mxu0 0.0
        %868 = vmatmul.mubr.f32.gmra.mrb[0].mxu0 %v748
        %v869 = vpop.f32.mrb[0].mxu0
        %v870 = vadd.f32 0.0, %v869
        %v871 = vpop.f32.mrb[0].mxu0
        %v872 = vadd.f32 0.0, %v871
        %873 = vmatprep.mubr.f32.mxu0 0.0
        %874 = vmatmul.mubr.f32.gmra.mrb[0].mxu0 %v751
        %v875 = vpop.f32.mrb[0].mxu0
        %v876 = vadd.f32 0.0, %v875
        %v877 = vpop.f32.mrb[0].mxu0
        %v878 = vadd.f32 0.0, %v877
        %879 = vmatprep.mubr.f32.mxu0 0.0
        %880 = vmatmul.mubr.f32.gmra.mrb[0].mxu0 %v754
        %v881 = vpop.f32.mrb[0].mxu0
        %v882 = vadd.f32 0.0, %v881
        %v883 = vpop.f32.mrb[0].mxu0
        %v884 = vadd.f32 0.0, %v883
        %885 = vmatprep.mubr.f32.mxu0 0.0
        %886 = vmatmul.mubr.f32.gmra.mrb[0].mxu0 %v757
        %v887 = vpop.f32.mrb[0].mxu0
        %v888 = vadd.f32 0.0, %v887
        %v889 = vpop.f32.mrb[0].mxu0
        %v890 = vadd.f32 0.0, %v889
        %891 = vmatprep.mubr.f32.mxu0 0.0
        %892 = vmatmul.mubr.f32.gmra.mrb[0].mxu0 %v760
        %v893 = vpop.f32.mrb[0].mxu0
        %v894 = vadd.f32 0.0, %v893
        %v895 = vpop.f32.mrb[0].mxu0
        %v896 = vadd.f32 0.0, %v895
        %897 = vmatprep.mubr.f32.mxu0 0.0
        %898 = vmatmul.mubr.f32.gmra.mrb[0].mxu0 %v763
        %v899 = vpop.f32.mrb[0].mxu0
        %v900 = vadd.f32 0.0, %v899
        %v901 = vpop.f32.mrb[0].mxu0
        %v902 = vadd.f32 0.0, %v901
        %903 = vmatprep.mubr.f32.mxu0 0.0
        %904 = vmatmul.mubr.f32.gmra.mrb[0].mxu0 %v766
        %v905 = vpop.f32.mrb[0].mxu0
        %v906 = vadd.f32 0.0, %v905
        %v907 = vpop.f32.mrb[0].mxu0
        %v908 = vadd.f32 0.0, %v907
        %909 = vmatprep.mubr.f32.mxu0 0.0
        %910 = vmatmul.mubr.f32.gmra.mrb[0].mxu0 %v769
        %v911 = vpop.f32.mrb[0].mxu0
        %v912 = vadd.f32 0.0, %v911
        %v913 = vpop.f32.mrb[0].mxu0
        %v914 = vadd.f32 0.0, %v913
        %915 = vmatprep.mubr.f32.mxu0 0.0
        %916 = vmatmul.mubr.f32.gmra.mrb[0].mxu0 %v772
        %v917 = vpop.f32.mrb[0].mxu0
        %v918 = vadd.f32 0.0, %v917
        %v919 = vpop.f32.mrb[0].mxu0
        %v920 = vadd.f32 0.0, %v919
        %921 = vmatprep.mubr.f32.mxu0 0.0
        %922 = vmatmul.mubr.f32.gmra.mrb[0].mxu0 %v775
        %v923 = vpop.f32.mrb[0].mxu0
        %v924 = vadd.f32 0.0, %v923
        %v925 = vpop.f32.mrb[0].mxu0
        %v926 = vadd.f32 0.0, %v925
        %927 = vmatprep.mubr.f32.mxu0 0.0
        %928 = vmatmul.mubr.f32.gmra.mrb[0].mxu0 %v778
        %v929 = vpop.f32.mrb[0].mxu0
        %v930 = vadd.f32 0.0, %v929
        %v931 = vpop.f32.mrb[0].mxu0
        %v932 = vadd.f32 0.0, %v931
        %933 = vmatprep.mubr.f32.mxu0 0.0
        %934 = vmatmul.mubr.f32.gmra.mrb[0].mxu0 %v781
        %v935 = vpop.f32.mrb[0].mxu0
        %v936 = vadd.f32 0.0, %v935
        %v937 = vpop.f32.mrb[0].mxu0
        %v938 = vadd.f32 0.0, %v937
        %939 = vmatprep.mubr.f32.mxu0 0.0
        %940 = vmatmul.mubr.f32.gmra.mrb[0].mxu0 %v784
        %v941 = vpop.f32.mrb[0].mxu0
        %v942 = vadd.f32 0.0, %v941
        %v943 = vpop.f32.mrb[0].mxu0
        %v944 = vadd.f32 0.0, %v943
        %945 = vmatprep.mubr.f32.mxu0 0.0
        %946 = vmatmul.mubr.f32.gmra.mrb[0].mxu0 %v787
        %v947 = vpop.f32.mrb[0].mxu0
        %v948 = vadd.f32 0.0, %v947
        %v949 = vpop.f32.mrb[0].mxu0
        %v950 = vadd.f32 0.0, %v949
        %951 = vmatprep.mubr.f32.mxu0 0.0
        %952 = vmatmul.mubr.f32.gmra.mrb[0].mxu0 %v790
        %v953 = vpop.f32.mrb[0].mxu0
        %v954 = vadd.f32 0.0, %v953
        %v955 = vpop.f32.mrb[0].mxu0
        %v956 = vadd.f32 0.0, %v955
        %957 = vdwg.mxu0
        %v958 = vmax.f32 %v864, %v866
        %959 = vmax.xlane.f32.xlu0 %v958
        %v960 = vpop.xlane.xlu0 %959
        %v961 = vmax.f32 %v870, %v872
        %962 = vmax.xlane.f32.xlu0 %v961
        %v963 = vpop.xlane.xlu0 %962
        %v964 = vmax.f32 %v876, %v878
        %965 = vmax.xlane.f32.xlu0 %v964
        %v966 = vpop.xlane.xlu0 %965
        %v967 = vmax.f32 %v882, %v884
        %968 = vmax.xlane.f32.xlu0 %v967
        %v969 = vpop.xlane.xlu0 %968
        %v970 = vmax.f32 %v888, %v890
        %971 = vmax.xlane.f32.xlu0 %v970
        %v972 = vpop.xlane.xlu0 %971
        %v973 = vmax.f32 %v894, %v896
        %974 = vmax.xlane.f32.xlu0 %v973
        %v975 = vpop.xlane.xlu0 %974
        %v976 = vmax.f32 %v900, %v902
        %977 = vmax.xlane.f32.xlu0 %v976
        %v978 = vpop.xlane.xlu0 %977
        %v979 = vmax.f32 %v906, %v908
        %980 = vmax.xlane.f32.xlu0 %v979
        %v981 = vpop.xlane.xlu0 %980
        %v982 = vmax.f32 %v912, %v914
        %983 = vmax.xlane.f32.xlu0 %v982
        %v984 = vpop.xlane.xlu0 %983
        %v985 = vmax.f32 %v918, %v920
        %986 = vmax.xlane.f32.xlu0 %v985
        %v987 = vpop.xlane.xlu0 %986
        %v988 = vmax.f32 %v924, %v926
        %989 = vmax.xlane.f32.xlu0 %v988
        %v990 = vpop.xlane.xlu0 %989
        %v991 = vmax.f32 %v930, %v932
        %992 = vmax.xlane.f32.xlu0 %v991
        %v993 = vpop.xlane.xlu0 %992
        %v994 = vmax.f32 %v936, %v938
        %995 = vmax.xlane.f32.xlu0 %v994
        %v996 = vpop.xlane.xlu0 %995
        %v997 = vmax.f32 %v942, %v944
        %998 = vmax.xlane.f32.xlu0 %v997
        %v999 = vpop.xlane.xlu0 %998
        %v1000 = vmax.f32 %v948, %v950
        %1001 = vmax.xlane.f32.xlu0 %v1000
        %v1002 = vpop.xlane.xlu0 %1001
        %v1003 = vmax.f32 %v954, %v956
        %1004 = vmax.xlane.f32.xlu0 %v1003
        %v1005 = vpop.xlane.xlu0 %1004
        %v1006 = vsub.f32 %v864, %v960
        %v1007 = vsub.f32 %v866, %v960
        %v1008 = vsub.f32 %v870, %v963
        %v1009 = vsub.f32 %v872, %v963
        %v1010 = vsub.f32 %v876, %v966
        %v1011 = vsub.f32 %v878, %v966
        %v1012 = vsub.f32 %v882, %v969
        %v1013 = vsub.f32 %v884, %v969
        %v1014 = vsub.f32 %v888, %v972
        %v1015 = vsub.f32 %v890, %v972
        %v1016 = vsub.f32 %v894, %v975
        %v1017 = vsub.f32 %v896, %v975
        %v1018 = vsub.f32 %v900, %v978
        %v1019 = vsub.f32 %v902, %v978
        %v1020 = vsub.f32 %v906, %v981
        %v1021 = vsub.f32 %v908, %v981
        %v1022 = vsub.f32 %v912, %v984
        %v1023 = vsub.f32 %v914, %v984
        %v1024 = vsub.f32 %v918, %v987
        %v1025 = vsub.f32 %v920, %v987
        %v1026 = vsub.f32 %v924, %v990
        %v1027 = vsub.f32 %v926, %v990
        %v1028 = vsub.f32 %v930, %v993
        %v1029 = vsub.f32 %v932, %v993
        %v1030 = vsub.f32 %v936, %v996
        %v1031 = vsub.f32 %v938, %v996
        %v1032 = vsub.f32 %v942, %v999
        %v1033 = vsub.f32 %v944, %v999
        %v1034 = vsub.f32 %v948, %v1002
        %v1035 = vsub.f32 %v950, %v1002
        %v1036 = vsub.f32 %v954, %v1005
        %v1037 = vsub.f32 %v956, %v1005
        %v1038 = vmul.f32 %v1006, 1.442695
        %v1039 = vpow.pop %v1038
        %v1040 = vmul.f32 %v1007, 1.442695
        %v1041 = vpow.pop %v1040
        %v1042 = vmul.f32 %v1008, 1.442695
        %v1043 = vpow.pop %v1042
        %v1044 = vmul.f32 %v1009, 1.442695
        %v1045 = vpow.pop %v1044
        %v1046 = vmul.f32 %v1010, 1.442695
        %v1047 = vpow.pop %v1046
        %v1048 = vmul.f32 %v1011, 1.442695
        %v1049 = vpow.pop %v1048
        %v1050 = vmul.f32 %v1012, 1.442695
        %v1051 = vpow.pop %v1050
        %v1052 = vmul.f32 %v1013, 1.442695
        %v1053 = vpow.pop %v1052
        %v1054 = vmul.f32 %v1014, 1.442695
        %v1055 = vpow.pop %v1054
        %v1056 = vmul.f32 %v1015, 1.442695
        %v1057 = vpow.pop %v1056
        %v1058 = vmul.f32 %v1016, 1.442695
        %v1059 = vpow.pop %v1058
        %v1060 = vmul.f32 %v1017, 1.442695
        %v1061 = vpow.pop %v1060
        %v1062 = vmul.f32 %v1018, 1.442695
        %v1063 = vpow.pop %v1062
        %v1064 = vmul.f32 %v1019, 1.442695
        %v1065 = vpow.pop %v1064
        %v1066 = vmul.f32 %v1020, 1.442695
        %v1067 = vpow.pop %v1066
        %v1068 = vmul.f32 %v1021, 1.442695
        %v1069 = vpow.pop %v1068
        %v1070 = vmul.f32 %v1022, 1.442695
        %v1071 = vpow.pop %v1070
        %v1072 = vmul.f32 %v1023, 1.442695
        %v1073 = vpow.pop %v1072
        %v1074 = vmul.f32 %v1024, 1.442695
        %v1075 = vpow.pop %v1074
        %v1076 = vmul.f32 %v1025, 1.442695
        %v1077 = vpow.pop %v1076
        %v1078 = vmul.f32 %v1026, 1.442695
        %v1079 = vpow.pop %v1078
        %v1080 = vmul.f32 %v1027, 1.442695
        %v1081 = vpow.pop %v1080
        %v1082 = vmul.f32 %v1028, 1.442695
        %v1083 = vpow.pop %v1082
        %v1084 = vmul.f32 %v1029, 1.442695
        %v1085 = vpow.pop %v1084
        %v1086 = vmul.f32 %v1030, 1.442695
        %v1087 = vpow.pop %v1086
        %v1088 = vmul.f32 %v1031, 1.442695
        %v1089 = vpow.pop %v1088
        %v1090 = vmul.f32 %v1032, 1.442695
        %v1091 = vpow.pop %v1090
        %v1092 = vmul.f32 %v1033, 1.442695
        %v1093 = vpow.pop %v1092
        %v1094 = vmul.f32 %v1034, 1.442695
        %v1095 = vpow.pop %v1094
        %v1096 = vmul.f32 %v1035, 1.442695
        %v1097 = vpow.pop %v1096
        %v1098 = vmul.f32 %v1036, 1.442695
        %v1099 = vpow.pop %v1098
        %v1100 = vmul.f32 %v1037, 1.442695
        %v1101 = vpow.pop %v1100
        %v1102 = vadd.f32 %v1039, %v1041
        %1103 = vadd.xlane.f32.xlu0 %v1102
        %v1104 = vpop.xlane.xlu0 %1103
        %v1105 = vadd.f32 %v1043, %v1045
        %1106 = vadd.xlane.f32.xlu0 %v1105
        %v1107 = vpop.xlane.xlu0 %1106
        %v1108 = vadd.f32 %v1047, %v1049
        %1109 = vadd.xlane.f32.xlu0 %v1108
        %v1110 = vpop.xlane.xlu0 %1109
        %v1111 = vadd.f32 %v1051, %v1053
        %1112 = vadd.xlane.f32.xlu0 %v1111
        %v1113 = vpop.xlane.xlu0 %1112
        %v1114 = vadd.f32 %v1055, %v1057
        %1115 = vadd.xlane.f32.xlu0 %v1114
        %v1116 = vpop.xlane.xlu0 %1115
        %v1117 = vadd.f32 %v1059, %v1061
        %1118 = vadd.xlane.f32.xlu0 %v1117
        %v1119 = vpop.xlane.xlu0 %1118
        %v1120 = vadd.f32 %v1063, %v1065
        %1121 = vadd.xlane.f32.xlu0 %v1120
        %v1122 = vpop.xlane.xlu0 %1121
        %v1123 = vadd.f32 %v1067, %v1069
        %1124 = vadd.xlane.f32.xlu0 %v1123
        %v1125 = vpop.xlane.xlu0 %1124
        %v1126 = vadd.f32 %v1071, %v1073
        %1127 = vadd.xlane.f32.xlu0 %v1126
        %v1128 = vpop.xlane.xlu0 %1127
        %v1129 = vadd.f32 %v1075, %v1077
        %1130 = vadd.xlane.f32.xlu0 %v1129
        %v1131 = vpop.xlane.xlu0 %1130
        %v1132 = vadd.f32 %v1079, %v1081
        %1133 = vadd.xlane.f32.xlu0 %v1132
        %v1134 = vpop.xlane.xlu0 %1133
        %v1135 = vadd.f32 %v1083, %v1085
        %1136 = vadd.xlane.f32.xlu0 %v1135
        %v1137 = vpop.xlane.xlu0 %1136
        %v1138 = vadd.f32 %v1087, %v1089
        %1139 = vadd.xlane.f32.xlu0 %v1138
        %v1140 = vpop.xlane.xlu0 %1139
        %v1141 = vadd.f32 %v1091, %v1093
        %1142 = vadd.xlane.f32.xlu0 %v1141
        %v1143 = vpop.xlane.xlu0 %1142
        %v1144 = vadd.f32 %v1095, %v1097
        %1145 = vadd.xlane.f32.xlu0 %v1144
        %v1146 = vpop.xlane.xlu0 %1145
        %v1147 = vadd.f32 %v1099, %v1101
        %1148 = vadd.xlane.f32.xlu0 %v1147
        %v1149 = vpop.xlane.xlu0 %1148
        %v1150 = vrcp.pop %v1104
        %v1151 = vrcp.pop %v1107
        %v1152 = vrcp.pop %v1110
        %v1153 = vrcp.pop %v1113
        %v1154 = vrcp.pop %v1116
        %v1155 = vrcp.pop %v1119
        %v1156 = vrcp.pop %v1122
        %v1157 = vrcp.pop %v1125
        %v1158 = vrcp.pop %v1128
        %v1159 = vrcp.pop %v1131
        %v1160 = vrcp.pop %v1134
        %v1161 = vrcp.pop %v1137
        %v1162 = vrcp.pop %v1140
        %v1163 = vrcp.pop %v1143
        %v1164 = vrcp.pop %v1146
        %v1165 = vrcp.pop %v1149
        %v1166 = vmul.f32 %v1039, %v1150
        %v1167 = vmul.f32 %v1041, %v1150
        %v1168 = vmul.f32 %v1043, %v1151
        %v1169 = vmul.f32 %v1045, %v1151
        %v1170 = vmul.f32 %v1047, %v1152
        %v1171 = vmul.f32 %v1049, %v1152
        %v1172 = vmul.f32 %v1051, %v1153
        %v1173 = vmul.f32 %v1053, %v1153
        %v1174 = vmul.f32 %v1055, %v1154
        %v1175 = vmul.f32 %v1057, %v1154
        %v1176 = vmul.f32 %v1059, %v1155
        %v1177 = vmul.f32 %v1061, %v1155
        %v1178 = vmul.f32 %v1063, %v1156
        %v1179 = vmul.f32 %v1065, %v1156
        %v1180 = vmul.f32 %v1067, %v1157
        %v1181 = vmul.f32 %v1069, %v1157
        %v1182 = vmul.f32 %v1071, %v1158
        %v1183 = vmul.f32 %v1073, %v1158
        %v1184 = vmul.f32 %v1075, %v1159
        %v1185 = vmul.f32 %v1077, %v1159
        %v1186 = vmul.f32 %v1079, %v1160
        %v1187 = vmul.f32 %v1081, %v1160
        %v1188 = vmul.f32 %v1083, %v1161
        %v1189 = vmul.f32 %v1085, %v1161
        %v1190 = vmul.f32 %v1087, %v1162
        %v1191 = vmul.f32 %v1089, %v1162
        %v1192 = vmul.f32 %v1091, %v1163
        %v1193 = vmul.f32 %v1093, %v1163
        %v1194 = vmul.f32 %v1095, %v1164
        %v1195 = vmul.f32 %v1097, %v1164
        %v1196 = vmul.f32 %v1099, %v1165
        %v1197 = vmul.f32 %v1101, %v1165
        %v1198 = vld [vmem:[#allocation4] sm:$0xff]
        %v1199 = vld [vmem:[#allocation4 + $0x8] sm:$0xff]
        %v1200 = vld [vmem:[#allocation4 + $0x10] sm:$0xff]
        %v1201 = vld [vmem:[#allocation4 + $0x18] sm:$0xff]
        %v1202 = vld [vmem:[#allocation4 + $0x20] sm:$0xff]
        %v1203 = vld [vmem:[#allocation4 + $0x28] sm:$0xff]
        %v1204 = vld [vmem:[#allocation4 + $0x30] sm:$0xff]
        %v1205 = vld [vmem:[#allocation4 + $0x38] sm:$0xff]
        %1206 = vmatprep.subr.mxu0 %v1167
        %1207 = vmatpush1.xpose.msra.mxu0 %v1166
        %1208 = vmatprep.subr.mxu0 %v1169
        %1209 = vmatpush1.xpose.msra.mxu0 %v1168
        %1210 = vmatprep.subr.mxu0 %v1171
        %1211 = vmatpush1.xpose.msra.mxu0 %v1170
        %1212 = vmatprep.subr.mxu0 %v1173
        %1213 = vmatpush1.xpose.msra.mxu0 %v1172
        %1214 = vmatprep.subr.mxu0 %v1175
        %1215 = vmatpush1.xpose.msra.mxu0 %v1174
        %1216 = vmatprep.subr.mxu0 %v1177
        %1217 = vmatpush1.xpose.msra.mxu0 %v1176
        %1218 = vmatprep.subr.mxu0 %v1179
        %1219 = vmatpush1.xpose.msra.mxu0 %v1178
        %1220 = vmatprep.subr.mxu0 %v1181
        %1221 = vmatpush1.xpose.msra.mxu0 %v1180
        %1222 = vmatprep.subr.mxu0 %v1183
        %1223 = vmatpush1.xpose.msra.mxu0 %v1182
        %1224 = vmatprep.subr.mxu0 %v1185
        %1225 = vmatpush1.xpose.msra.mxu0 %v1184
        %1226 = vmatprep.subr.mxu0 %v1187
        %1227 = vmatpush1.xpose.msra.mxu0 %v1186
        %1228 = vmatprep.subr.mxu0 %v1189
        %1229 = vmatpush1.xpose.msra.mxu0 %v1188
        %1230 = vmatprep.subr.mxu0 %v1191
        %1231 = vmatpush1.xpose.msra.mxu0 %v1190
        %1232 = vmatprep.subr.mxu0 %v1193
        %1233 = vmatpush1.xpose.msra.mxu0 %v1192
        %1234 = vmatprep.subr.mxu0 %v1195
        %1235 = vmatpush1.xpose.msra.mxu0 %v1194
        %1236 = vmatprep.subr.mxu0 %v1197
        %1237 = vmatpush1.xpose.msra.mxu0 %v1196
        %1238 = vmatprep.subr.mxu0 0.0
        %1239 = vmatpush1.xpose.msra.mxu0 0.0
        %1240 = vmatprep.subr.mxu0 0.0
        %1241 = vmatpush1.xpose.msra.mxu0 0.0
        %1242 = vmatprep.subr.mxu0 0.0
        %1243 = vmatpush1.xpose.msra.mxu0 0.0
        %1244 = vmatprep.subr.mxu0 0.0
        %1245 = vmatpush1.xpose.msra.mxu0 0.0
        %1246 = vmatprep.subr.mxu0 0.0
        %1247 = vmatpush1.xpose.msra.mxu0 0.0
        %1248 = vmatprep.subr.mxu0 0.0
        %1249 = vmatpush1.xpose.msra.mxu0 0.0
        %1250 = vmatprep.subr.mxu0 0.0
        %1251 = vmatpush1.xpose.msra.mxu0 0.0
        %1252 = vmatprep.subr.mxu0 0.0
        %1253 = vmatpush1.xpose.msra.mxu0 0.0
        %1254 = vmatprep.subr.mxu0 0.0
        %1255 = vmatpush1.xpose.msra.mxu0 0.0
        %1256 = vmatprep.subr.mxu0 0.0
        %1257 = vmatpush1.xpose.msra.mxu0 0.0
        %1258 = vmatprep.subr.mxu0 0.0
        %1259 = vmatpush1.xpose.msra.mxu0 0.0
        %1260 = vmatprep.subr.mxu0 0.0
        %1261 = vmatpush1.xpose.msra.mxu0 0.0
        %1262 = vmatprep.subr.mxu0 0.0
        %1263 = vmatpush1.xpose.msra.mxu0 0.0
        %1264 = vmatprep.subr.mxu0 0.0
        %1265 = vmatpush1.xpose.msra.mxu0 0.0
        %1266 = vmatprep.subr.mxu0 0.0
        %1267 = vmatpush1.xpose.msra.mxu0 0.0
        %1268 = vmatprep.subr.mxu0 0.0
        %1269 = vmatpush1.xpose.msra.mxu0 0.0
        %1270 = vmatprep.mubr.f32.mxu0 %v1199
        %1271 = vmatmul.mubr.f32.gmra.mrb[0].mxu0 %v1198
        %v1272 = vpop.f32.mrb[0].mxu0
        %v1273 = vadd.f32 0.0, %v1272
        %v1274 = vpop.f32.mrb[0].mxu0
        %1275 = vmatprep.mubr.f32.mxu0 %v1201
        %1276 = vmatmul.mubr.f32.gmra.mrb[0].mxu0 %v1200
        %v1277 = vpop.f32.mrb[0].mxu0
        %v1278 = vadd.f32 0.0, %v1277
        %v1279 = vpop.f32.mrb[0].mxu0
        %1280 = vmatprep.mubr.f32.mxu0 %v1203
        %1281 = vmatmul.mubr.f32.gmra.mrb[0].mxu0 %v1202
        %v1282 = vpop.f32.mrb[0].mxu0
        %v1283 = vadd.f32 0.0, %v1282
        %v1284 = vpop.f32.mrb[0].mxu0
        %1285 = vmatprep.mubr.f32.mxu0 %v1205
        %1286 = vmatmul.mubr.f32.gmra.mrb[0].mxu0 %v1204
        %v1287 = vpop.f32.mrb[0].mxu0
        %v1288 = vadd.f32 0.0, %v1287
        %v1289 = vpop.f32.mrb[0].mxu0
        %1290 = vdwg.mxu0
        %s1291 = sld [smem:[#allocation5]]
        %v1292 = vstv %s1291
        %v1293 = vmul.f32 %v1292, %v1273
        %v1294 = vmul.f32 %v1292, %v1278
        %v1295 = vmul.f32 %v1292, %v1283
        %v1296 = vmul.f32 %v1292, %v1288
        %s1297 = smul.addr %s703, 8
        %s1298 = scalar_lea.vmem %s339, %s1297 [#allocation6]
        %v1299 = vld [vmem:[%s1298] sm:$0xff]
        %v1300 = vld [vmem:[%s1298 + $0x10] sm:$0xff]
        %v1301 = vld [vmem:[%s1298 + $0x20] sm:$0xff]
        %v1302 = vld [vmem:[%s1298 + $0x30] sm:$0xff]
        %v1303 = vadd.f32 %v1293, %v1299
        %v1304 = vadd.f32 %v1294, %v1300
        %v1305 = vadd.f32 %v1295, %v1301
        %v1306 = vadd.f32 %v1296, %v1302
        %1307 = vst [vmem:[%s371] sm:$0xff] %v1303
        %1308 = vst [vmem:[%s371 + $0x8] sm:$0xff] %v1304
        %1309 = vst [vmem:[%s371 + $0x10] sm:$0xff] %v1305
        %1310 = vst [vmem:[%s371 + $0x18] sm:$0xff] %v1306
        %1311 = vst [vmem:[%s378] sm:$0xff] %v1166
        %1312 = vst [vmem:[%s378 + $0x8] sm:$0xff] %v1167
        %1313 = vst [vmem:[%s378 + $0x10] sm:$0xff] %v1168
        %1314 = vst [vmem:[%s378 + $0x18] sm:$0xff] %v1169
        %1315 = vst [vmem:[%s378 + $0x20] sm:$0xff] %v1170
        %1316 = vst [vmem:[%s378 + $0x28] sm:$0xff] %v1171
        %1317 = vst [vmem:[%s378 + $0x30] sm:$0xff] %v1172
        %1318 = vst [vmem:[%s378 + $0x38] sm:$0xff] %v1173
        %1319 = vst [vmem:[%s378 + $0x40] sm:$0xff] %v1174
        %1320 = vst [vmem:[%s378 + $0x48] sm:$0xff] %v1175
        %1321 = vst [vmem:[%s378 + $0x50] sm:$0xff] %v1176
        %1322 = vst [vmem:[%s378 + $0x58] sm:$0xff] %v1177
        %1323 = vst [vmem:[%s378 + $0x60] sm:$0xff] %v1178
        %1324 = vst [vmem:[%s378 + $0x68] sm:$0xff] %v1179
        %1325 = vst [vmem:[%s378 + $0x70] sm:$0xff] %v1180
        %1326 = vst [vmem:[%s378 + $0x78] sm:$0xff] %v1181
        %1327 = vst [vmem:[%s378 + $0x80] sm:$0xff] %v1182
        %1328 = vst [vmem:[%s378 + $0x88] sm:$0xff] %v1183
        %1329 = vst [vmem:[%s378 + $0x90] sm:$0xff] %v1184
        %1330 = vst [vmem:[%s378 + $0x98] sm:$0xff] %v1185
        %1331 = vst [vmem:[%s378 + $0xa0] sm:$0xff] %v1186
        %1332 = vst [vmem:[%s378 + $0xa8] sm:$0xff] %v1187
        %1333 = vst [vmem:[%s378 + $0xb0] sm:$0xff] %v1188
        %1334 = vst [vmem:[%s378 + $0xb8] sm:$0xff] %v1189
        %1335 = vst [vmem:[%s378 + $0xc0] sm:$0xff] %v1190
        %1336 = vst [vmem:[%s378 + $0xc8] sm:$0xff] %v1191
        %1337 = vst [vmem:[%s378 + $0xd0] sm:$0xff] %v1192
        %1338 = vst [vmem:[%s378 + $0xd8] sm:$0xff] %v1193
        %1339 = vst [vmem:[%s378 + $0xe0] sm:$0xff] %v1194
        %1340 = vst [vmem:[%s378 + $0xe8] sm:$0xff] %v1195
        %1341 = vst [vmem:[%s378 + $0xf0] sm:$0xff] %v1196
        %1342 = vst [vmem:[%s378 + $0xf8] sm:$0xff] %v1197
        %s1343 = sand.u32 %s226, 1
        %s1344 = scalar_lea.sflag [#allocation8], %s1343
        %s1345 = sand.u32 %s226, 1
        %s1346 = smul.addr %s1345, 32
        %s1347 = scalar_lea.vmem [#allocation9], %s1346
        %s1348 = sand.u32 %s254, 1
        %s1349 = scalar_lea.sflag [#allocation11], %s1348
        %s1350 = sand.u32 %s254, 1
        %s1351 = smul.addr %s1350, 256
        %s1352 = scalar_lea.vmem [#allocation10], %s1351
        // Predicated region
        $region61: #{tpu_custom_call.1} parent=51 // pred_check
          %p1353 = pneg %p236
        $region62: #{tpu_custom_call.1} parent=51 // pred_check_branch
          %1355 = sbr.rel (%p1353) target = $region64
        $region63: #{tpu_custom_call.1} parent=51 // pred_region
          %s1357 = ssub.s32 512, 512
          %1358 = vsyncadd %s1344, %s1357
          %s1359 = smul.addr %s35, 8
          %s1360 = sadd.s32 %s36, %s1359
          %s1361 = smul.addr %s1360, 128
          %s1362 = scalar_lea.hbm %s8, %s1361
          %s1363 = sshll.u32 %s1347, 4
          %s1364 = int_to_ptr.vmem [resolvable:$true] %s1363
          %1369 = dma.vmem_to_hbm [thread:$0]  %s1364, 512, %s1362, %s1344, 128, 256, 8
        $region64: #{tpu_custom_call.1} parent=51 // pred_fallthru
          _
        // Predicated region
        $region65: #{tpu_custom_call.1} parent=51 // pred_check
          %p1370 = pneg %p264
        $region66: #{tpu_custom_call.1} parent=51 // pred_check_branch
          %1372 = sbr.rel (%p1370) target = $region68
        $region67: #{tpu_custom_call.1} parent=51 // pred_region
          %s1373 = smul.u32 16, %s36
          %s1375 = ssub.s32 4096, 4096
          %1376 = vsyncadd %s1349, %s1375
          %s1377 = smul.addr %s1373, 2
          %s1378 = smul.addr %s35, 64
          %s1379 = sadd.s32 %s1377, %s1378
          %s1380 = smul.addr %s1379, 128
          %s1381 = scalar_lea.hbm %s9, %s1380
          %s1382 = sshll.u32 %s1352, 4
          %s1383 = int_to_ptr.vmem [resolvable:$true] %s1382
          %1388 = dma.vmem_to_hbm [thread:$0]  %s1383, 4096, %s1381, %s1349, 256, 256, 16
        $region68: #{tpu_custom_call.1} parent=51 // pred_fallthru
          _
      $region52: #{tpu_custom_call.1} parent=5 // pred_fallthru
        _
      %p1389 = scmp.le.s32.totalorder 2, %s26
      // Predicated region
      $region69: #{tpu_custom_call.1} parent=5 // pred_check
        %p1390 = pneg %p1389
      $region70: #{tpu_custom_call.1} parent=5 // pred_check_branch
        %1392 = sbr.rel (%p1390) target = $region72
      $region71: #{tpu_custom_call.1} parent=5 // pred_region
        %s1393 = ssub.s32 %s26, 2
        // Predicated region
        $region73: #{tpu_custom_call.1} parent=71 // pred_check
          %p1394 = pneg %p242
        $region74: #{tpu_custom_call.1} parent=71 // pred_check_branch
          %1396 = sbr.rel (%p1394) target = $region76
        $region75: #{tpu_custom_call.1} parent=71 // pred_region
          %s1397 = sand.u32 %s227, 1
          %s1398 = scalar_lea.sflag [#allocation8], %s1397
          %s1399 = sand.u32 %s227, 1
          %s1400 = smul.addr %s1399, 32
          %s1401 = scalar_lea.vmem [#allocation9], %s1400
          %1402 = dma.done %s1398, 512
        $region76: #{tpu_custom_call.1} parent=71 // pred_fallthru
          _
        // Predicated region
        $region77: #{tpu_custom_call.1} parent=71 // pred_check
          %p1403 = pneg %p270
        $region78: #{tpu_custom_call.1} parent=71 // pred_check_branch
          %1405 = sbr.rel (%p1403) target = $region80
        $region79: #{tpu_custom_call.1} parent=71 // pred_region
          %s1406 = sand.u32 %s255, 1
          %s1407 = scalar_lea.sflag [#allocation11], %s1406
          %s1408 = sand.u32 %s255, 1
          %s1409 = smul.addr %s1408, 256
          %s1410 = scalar_lea.vmem [#allocation10], %s1409
          %1411 = dma.done %s1407, 4096
        $region80: #{tpu_custom_call.1} parent=71 // pred_fallthru
          _
      $region72: #{tpu_custom_call.1} parent=5 // pred_fallthru
        _
    $region6: #{tpu_custom_call.1} parent=1 // loop_footer
      %s30 = sadd.s32 1, %s26
    $region7: #{tpu_custom_call.1} parent=1 // loop_footer_branch
      %25 = sbr.rel target = $region3
    $region8: #{tpu_custom_call.1} parent=1 // loop_exit
      _
    %1412 = vsyncpa [#allocation7], 1
    %s1413 = scalar_lea.sflag [#allocation7], 1
    %1414 = vsyncpa %s1413, 1
    %1415 = vsyncpa [#allocation8], 1
    %s1416 = scalar_lea.sflag [#allocation8], 1
    %1417 = vsyncpa %s1416, 1
    %1418 = vsyncpa [#allocation11], 1
    %s1419 = scalar_lea.sflag [#allocation11], 1
    %1420 = vsyncpa %s1419, 1

</llo_original>
